<compile_context>
chip_gen: v6e
topology: v6e:2x2x1
jax: 0.10.0
libtpu: 0.0.40
codegen_flags: <defaults>
</compile_context>

<pallas_src>
import functools

import jax
import jax.numpy as jnp
from jax import lax
from jax.experimental import pallas as pl
from jax.experimental.pallas import tpu as pltpu

NEG_INF = -1e30


def _round_up(x, m):
    return (x + m - 1) // m * m


def _pick_vmem_limit():
    """~75% of physical VMEM, capped at 96 MiB (v5e/v6e: 96 MiB, v7x: 48 MiB)."""
    try:
        cap = int(pltpu.get_tpu_info().vmem_capacity_bytes)
    except Exception:
        cap = 64 * 1024 * 1024          # conservative cross-generation fallback
    return max(32 * 1024 * 1024, min(96 * 1024 * 1024, (cap * 3) // 4))


_VMEM_LIMIT = _pick_vmem_limit()


# --------------------------------------------------------------------------
# Fused linear kernel (matmul + bias + optional activation), tiled over M.
# --------------------------------------------------------------------------
def _linear_kernel(x_ref, w_ref, b_ref, o_ref, *, activation):
    x = x_ref[...].astype(jnp.bfloat16)          # cast in-kernel: no XLA pre-pass
    y = jnp.dot(x, w_ref[...], preferred_element_type=jnp.float32) + b_ref[...]
    if activation == "tanh":
        y = jnp.tanh(y)
    elif activation == "relu":
        y = jnp.maximum(y, 0.0)
    o_ref[...] = y.astype(o_ref.dtype)


def pallas_linear(x, w, b, activation=None, out_dtype=jnp.float32, tile_m=512):
    """x: (M, K) f32/bf16, w: (K, N), b: (N,) -> (M, N) out_dtype.

    bf16 MXU operands (cast inside the kernel), f32 bias/activation.  M is
    tiled ("parallel" so the v7x megacore can split it); weight/bias stay
    VMEM-resident via constant index_maps; N is padded to a multiple of 128 so
    output stores are lane-dense.  out_dtype=bf16 halves HBM writes for
    activations whose only consumer is another bf16 matmul.
    """
    M, K = x.shape
    N = w.shape[1]
    Np = _round_up(N, 128)
    tm = min(tile_m, _round_up(M, 8))
    Mp = _round_up(M, tm)

    if Mp != M:
        x = jnp.pad(x, ((0, Mp - M), (0, 0)))
    w_p = w.astype(jnp.float32)
    if Np != N:
        w_p = jnp.pad(w_p, ((0, 0), (0, Np - N)))
    w_p = w_p.astype(jnp.bfloat16)
    b_p = jnp.pad(b.astype(jnp.float32), (0, Np - N)).reshape(1, Np)

    out = pl.pallas_call(
        functools.partial(_linear_kernel, activation=activation),
        out_shape=jax.ShapeDtypeStruct((Mp, Np), out_dtype),
        grid=(Mp // tm,),
        in_specs=[
            pl.BlockSpec((tm, K), lambda i: (i, 0)),
            pl.BlockSpec((K, Np), lambda i: (0, 0)),   # resident weight
            pl.BlockSpec((1, Np), lambda i: (0, 0)),   # resident bias
        ],
        out_specs=pl.BlockSpec((tm, Np), lambda i: (i, 0)),
        compiler_params=pltpu.CompilerParams(
            dimension_semantics=("parallel",),
            vmem_limit_bytes=_VMEM_LIMIT),
        cost_estimate=pl.CostEstimate(
            flops=2 * Mp * K * Np,
            transcendentals=Mp * Np if activation == "tanh" else 0,
            bytes_accessed=x.dtype.itemsize * Mp * K + 2 * K * Np + 4 * Np
                           + jnp.dtype(out_dtype).itemsize * Mp * Np),
    )(x, w_p, b_p)
    if Mp != M or Np != N:
        out = out[:M, :N]
    return out


# --------------------------------------------------------------------------
# Trivial-joiner normalizer:  logsumexp_c(am[t,c] + lm[s,c]), (B, T)-tiled.
# --------------------------------------------------------------------------
def _trivial_joint_normalizer_kernel(am_ref, lmt_ref, o_ref):
    am = am_ref[0]                                   # (Tt, C) f32
    lmt = lmt_ref[0]                                 # (C, S1p) f32
    am_max = jnp.maximum(jnp.max(am, axis=1, keepdims=True), NEG_INF)
    lm_max = jnp.maximum(jnp.max(lmt, axis=0, keepdims=True), NEG_INF)
    am_e = jnp.exp(am - am_max).astype(jnp.bfloat16)
    lm_e = jnp.exp(lmt - lm_max).astype(jnp.bfloat16)
    prod = jnp.dot(am_e, lm_e, preferred_element_type=jnp.float32)
    prod = jnp.maximum(prod, 1e-30)                  # avoid log(0) on underflow
    o_ref[0] = jnp.log(prod) + am_max + lm_max


def trivial_joint_normalizers(am, lm, tile_t=256):
    """normalizers[b,t,s] = logsumexp_c(am[b,t,c] + lm[b,s,c])."""
    B, T, C = am.shape
    S1 = lm.shape[1]
    S1p = _round_up(S1, 128)                         # lane-dense output columns
    Tt = min(tile_t, _round_up(T, 8))
    Tp = _round_up(T, Tt)

    am_f = am.astype(jnp.float32)
    if Tp != T:
        am_f = jnp.pad(am_f, ((0, 0), (0, Tp - T), (0, 0)))
    lm_t = jnp.transpose(lm.astype(jnp.float32), (0, 2, 1))          # (B, C, S+1)
    if S1p != S1:
        lm_t = jnp.pad(lm_t, ((0, 0), (0, 0), (0, S1p - S1)))

    out = pl.pallas_call(
        _trivial_joint_normalizer_kernel,
        out_shape=jax.ShapeDtypeStruct((B, Tp, S1p), jnp.float32),
        grid=(B, Tp // Tt),
        in_specs=[
            pl.BlockSpec((1, Tt, C), lambda bi, ti: (bi, ti, 0)),
            pl.BlockSpec((1, C, S1p), lambda bi, ti: (bi, 0, 0)),    # resident lm
        ],
        out_specs=pl.BlockSpec((1, Tt, S1p), lambda bi, ti: (bi, ti, 0)),
        compiler_params=pltpu.CompilerParams(
            dimension_semantics=("parallel", "parallel"),
            vmem_limit_bytes=_VMEM_LIMIT),
        cost_estimate=pl.CostEstimate(
            flops=2 * B * Tp * C * S1p,
            transcendentals=B * Tp * C + B * C * S1p + B * Tp * S1p,
            bytes_accessed=4 * (B * Tp * C + B * C * S1p + B * Tp * S1p)),
    )(am_f, lm_t)
    return out[:, :T, :S1]


# --------------------------------------------------------------------------
# Pruned joiner with fused vocab reduction:
#   logits = tanh(am + lm_pruned) @ W + b   (never leaves VMEM)
#   px_pr  = logits[sym]   - logsumexp_V(logits)
#   py_pr  = logits[blank] - logsumexp_V(logits)
# --------------------------------------------------------------------------
def _joiner_kernel(am_ref, lm_ref, sym_ref, w_ref, b_ref, px_ref, py_ref, *,
                   num_r, vocab, blank_id):
    am = am_ref[0].astype(jnp.bfloat16)              # (Tt, J), reused for all R
    syms = sym_ref[0]                                # (Tt, R) int32
    w = w_ref[...]                                   # (J, Vp) bf16
    bias = b_ref[...]                                # (1, Vp) f32
    rows = am.shape[0]
    vp = bias.shape[1]
    lane = lax.broadcasted_iota(jnp.int32, (rows, vp), 1)
    valid = lane < vocab
    px_cols, py_cols = [], []
    for r in range(num_r):
        # bf16 add + tanh feeds the MXU directly (v6e/v7x bf16 VPU/EUP).
        h = jnp.tanh(am + lm_ref[0, r])
        logits = jnp.dot(h, w, preferred_element_type=jnp.float32) + bias
        logits = jnp.where(valid, logits, NEG_INF)   # mask padded vocab lanes
        m = jnp.max(logits, axis=1, keepdims=True)
        norm = m + jnp.log(jnp.sum(jnp.exp(logits - m), axis=1, keepdims=True))
        sym = syms[:, r:r + 1]                       # (Tt, 1)
        sym_logit = jnp.sum(jnp.where(lane == sym, logits, 0.0),
                            axis=1, keepdims=True)
        blank_logit = jnp.sum(jnp.where(lane == blank_id, logits, 0.0),
                              axis=1, keepdims=True)
        px_cols.append(sym_logit - norm)
        py_cols.append(blank_logit - norm)
    px_ref[0] = jnp.concatenate(px_cols, axis=1)     # (Tt, R)
    py_ref[0] = jnp.concatenate(py_cols, axis=1)


def pallas_joiner(am_proj, lm_pruned, pruned_syms, w, b, blank_id, tile_t=128):
    """am_proj: (B,T,J) f32; lm_pruned: (B,R,T,J) bf16; pruned_syms: (B,T,R)
       -> (px_pr, py_pr) each (B,T,R) f32 (already normalized log-probs)."""
    B, T, J = am_proj.shape
    R = lm_pruned.shape[1]
    V = w.shape[1]
    Vp = _round_up(V, 128)
    Tt = min(tile_t, _round_up(T, 8))
    Tp = _round_up(T, Tt)

    if Tp != T:
        am_proj = jnp.pad(am_proj, ((0, 0), (0, Tp - T), (0, 0)))
        lm_pruned = jnp.pad(lm_pruned, ((0, 0), (0, 0), (0, Tp - T), (0, 0)))
        pruned_syms = jnp.pad(pruned_syms, ((0, 0), (0, Tp - T), (0, 0)))
    w_p = w.astype(jnp.float32)
    if Vp != V:
        w_p = jnp.pad(w_p, ((0, 0), (0, Vp - V)))
    w_p = w_p.astype(jnp.bfloat16)
    b_p = jnp.pad(b.astype(jnp.float32), (0, Vp - V)).reshape(1, Vp)

    px, py = pl.pallas_call(
        functools.partial(_joiner_kernel, num_r=R, vocab=V, blank_id=blank_id),
        out_shape=(jax.ShapeDtypeStruct((B, Tp, R), jnp.float32),
                   jax.ShapeDtypeStruct((B, Tp, R), jnp.float32)),
        grid=(B, Tp // Tt),
        in_specs=[
            pl.BlockSpec((1, Tt, J), lambda bi, ti: (bi, ti, 0)),
            pl.BlockSpec((1, R, Tt, J), lambda bi, ti: (bi, 0, ti, 0)),
            pl.BlockSpec((1, Tt, R), lambda bi, ti: (bi, ti, 0)),
            pl.BlockSpec((J, Vp), lambda bi, ti: (0, 0)),     # resident weight
            pl.BlockSpec((1, Vp), lambda bi, ti: (0, 0)),     # resident bias
        ],
        out_specs=(pl.BlockSpec((1, Tt, R), lambda bi, ti: (bi, ti, 0)),
                   pl.BlockSpec((1, Tt, R), lambda bi, ti: (bi, ti, 0))),
        compiler_params=pltpu.CompilerParams(
            dimension_semantics=("parallel", "parallel"),
            vmem_limit_bytes=_VMEM_LIMIT),
        cost_estimate=pl.CostEstimate(
            flops=2 * B * Tp * R * J * Vp,
            transcendentals=B * Tp * R * (J + Vp),
            bytes_accessed=4 * B * Tp * J + 2 * B * R * Tp * J
                           + 4 * B * Tp * R + 2 * J * Vp + 8 * B * Tp * R),
    )(am_proj, lm_pruned, pruned_syms.astype(jnp.int32), w_p, b_p)
    return px[:, :T], py[:, :T]


# --------------------------------------------------------------------------
# Mutual-information (RNN-T alpha) DP kernel.
# --------------------------------------------------------------------------
def _mi_alpha_kernel(c_ref, py_ref, tl_ref, sel_ref, score_ref, alpha_sc, *,
                     n_valid, t_block):
    """t_block DP columns per grid step; alpha resident in VMEM scratch.

    Column recurrence:  a[s] = logaddexp(b[s], a[s-1] + c[s]),  a[-1] = -inf,
    b[s] = alpha_prev[s] + py[s].  The t=0 column is folded into the same
    recurrence via a synthetic py column [0, -inf, ...] with alpha_prev = 0.
    The s-recurrence is solved with a Hillis-Steele scan over log-semiring
    affine maps x -> logaddexp(B, x + C); shifts are pltpu.roll (XLU) + mask.
    Only the value alpha[t_lens[b], s_lens[b]] is accumulated into score_ref.
    """
    tb = pl.program_id(1)
    bsz, sp = alpha_sc.shape
    lane = lax.broadcasted_iota(jnp.int32, (bsz, sp), 1)

    @pl.when(tb == 0)
    def _():
        alpha_sc[...] = jnp.zeros_like(alpha_sc)
        score_ref[...] = jnp.zeros_like(score_ref)

    tl = tl_ref[...]                                 # (Bc, 1) int32
    sel = sel_ref[...]                               # (Bc, Sp) one-hot f32

    def shift_right(x, d, fill):
        return jnp.where(lane < d, fill, pltpu.roll(x, shift=d, axis=1))

    def body(step, carry):
        t_glob = tb * t_block + step
        cc = c_ref[step]                             # (Bc, Sp)
        bb = alpha_sc[...] + py_ref[step]            # "from-left" term
        d = 1
        while d < n_valid:                           # ceil(log2(S+1)) steps
            b_sh = shift_right(bb, d, NEG_INF)
            c_sh = shift_right(cc, d, 0.0)
            bb = jnp.logaddexp(bb, b_sh + cc)
            cc = c_sh + cc
            d *= 2
        alpha_sc[...] = bb
        # Capture alpha[t_lens[b], s_lens[b]] the step it becomes available.
        score_ref[...] += jnp.where(tl == t_glob, bb * sel, 0.0)
        return carry

    lax.fori_loop(0, t_block, body, 0)
    # Keep the padded-lane sentinels bounded across many t-blocks.
    alpha_sc[...] = jnp.where(lane < n_valid, alpha_sc[...], NEG_INF)


def mutual_information(px, py, s_lens, t_lens):
    """k2-style alpha recursion; returns the log-prob score per utterance."""
    B, S, Tp1 = px.shape
    T = Tp1 - 1
    S1 = S + 1
    Sp = _round_up(S1, 128)                          # lane-dense DP width
    Bp = _round_up(B, 8)
    Bc = 8                                           # batch-chunk ("parallel")
    Tt = min(32, Tp1)                                # DP columns per grid step
    Tcols = _round_up(Tp1, Tt)

    # c[b, s, t] = px[b, s-1, t] for s >= 1, else 0 (pad positions also 0).
    c = jnp.concatenate([jnp.zeros((B, 1, Tp1), jnp.float32),
                         px.astype(jnp.float32)], axis=1)            # (B,S+1,T+1)
    c = jnp.pad(c, ((0, Bp - B), (0, Sp - S1), (0, Tcols - Tp1)))
    c_t = jnp.transpose(c, (2, 0, 1))                                # (Tc,Bp,Sp)

    py_l = jnp.pad(py.astype(jnp.float32),
                   ((0, 0), (0, Sp - S1), (0, 0)),
                   constant_values=NEG_INF)                          # lane pad
    py_l = jnp.pad(py_l, ((0, Bp - B), (0, 0), (0, 0)))              # batch pad
    py_t = jnp.transpose(py_l, (2, 0, 1))                            # (T,Bp,Sp)
    # Synthetic t=0 column [0, -inf, ...] folds the alpha init into the scan.
    col0 = jnp.full((1, Bp, Sp), NEG_INF, jnp.float32).at[:, :, 0].set(0.0)
    py_t = jnp.concatenate([col0, py_t], axis=0)                     # (T+1,Bp,Sp)
    py_t = jnp.pad(py_t, ((0, Tcols - Tp1), (0, 0), (0, 0)))

    tl = jnp.pad(t_lens.astype(jnp.int32), (0, Bp - B)).reshape(Bp, 1)
    s_pad = jnp.pad(s_lens.astype(jnp.int32), (0, Bp - B))
    sel = (jnp.arange(Sp, dtype=jnp.int32)[None, :] ==
           s_pad[:, None]).astype(jnp.float32)                       # (Bp, Sp)

    score_map = pl.pallas_call(
        functools.partial(_mi_alpha_kernel, n_valid=S1, t_block=Tt),
        out_shape=jax.ShapeDtypeStruct((Bp, Sp), jnp.float32),
        grid=(Bp // Bc, Tcols // Tt),
        in_specs=[
            pl.BlockSpec((Tt, Bc, Sp), lambda bc, tb: (tb, bc, 0)),
            pl.BlockSpec((Tt, Bc, Sp), lambda bc, tb: (tb, bc, 0)),
            pl.BlockSpec((Bc, 1), lambda bc, tb: (bc, 0)),
            pl.BlockSpec((Bc, Sp), lambda bc, tb: (bc, 0)),
        ],
        out_specs=pl.BlockSpec((Bc, Sp), lambda bc, tb: (bc, 0)),
        scratch_shapes=[pltpu.VMEM((Bc, Sp), jnp.float32)],
        compiler_params=pltpu.CompilerParams(
            dimension_semantics=("parallel", "arbitrary"),
            vmem_limit_bytes=_VMEM_LIMIT),
    )(c_t, py_t, tl, sel)
    return jnp.sum(score_map[:B], axis=1)            # one-hot -> selected alpha


# --------------------------------------------------------------------------
# Model components (glue around the kernels)
# --------------------------------------------------------------------------
def encoder_forward(enc_params, x, x_lens):
    # TODO(synk): the injected LSTM EncoderInterface is replaced by a single
    # projection + tanh; x_lens pass through unchanged (no subsampling).
    N, T, C = x.shape
    out = pallas_linear(x.reshape(N * T, C), enc_params["w"], enc_params["b"],
                        activation="tanh", out_dtype=jnp.bfloat16)
    return out.reshape(N, T, -1), x_lens


def decoder_forward(dec_params, tokens):
    """Stateless decoder: embedding + 2-frame causal context as dense matmul."""
    # TODO(synk): grouped Conv1d of the original Decoder is approximated by a
    # dense matmul over the concatenated (prev, cur) context embeddings.
    N, U = tokens.shape
    emb = jnp.take(dec_params["embedding"], tokens, axis=0)       # (N, U, D)
    D = emb.shape[-1]
    prev = jnp.concatenate([jnp.zeros_like(emb[:, :1]), emb[:, :-1]], axis=1)
    ctx = jnp.concatenate([prev, emb], axis=-1)                    # (N, U, 2D)
    out = pallas_linear(ctx.reshape(N * U, 2 * D), dec_params["conv_w"],
                        dec_params["conv_b"], activation="relu",
                        out_dtype=jnp.bfloat16)
    return out.reshape(N, U, D)


def simple_rnnt_loss(am, lm, symbols, blank, s_lens, t_lens):
    """rnnt_loss_smoothed with lm_scale=am_scale=0 (== rnnt_loss_simple)."""
    B, T, V = am.shape
    S = symbols.shape[1]
    norm = trivial_joint_normalizers(am, lm)                       # (B,T,S+1)

    # TODO(synk): emitting the normalizer/symbol gathers t-major would remove
    # the transposes below; kept in XLA for clarity.
    idx = jnp.broadcast_to(symbols[:, None, :], (B, T, S))
    am_sym = jnp.take_along_axis(am, idx, axis=2)                  # (B,T,S)
    lm_sym = jnp.take_along_axis(lm[:, :S, :], symbols[:, :, None],
                                 axis=2)[..., 0]                   # (B,S)
    px = (jnp.transpose(am_sym, (0, 2, 1)) + lm_sym[:, :, None]
          - jnp.transpose(norm[:, :, :S], (0, 2, 1)))              # (B,S,T)
    px = jnp.concatenate([px, jnp.full((B, S, 1), NEG_INF, jnp.float32)],
                         axis=2)                                   # (B,S,T+1)
    # fix_for_boundary: no symbol emission at/after the last valid frame.
    px = px.at[jnp.arange(B)[:, None], jnp.arange(S)[None, :],
               t_lens[:, None]].set(NEG_INF)
    py = (am[:, :, blank][:, None, :] + lm[:, :, blank][:, :, None]
          - jnp.transpose(norm, (0, 2, 1)))                        # (B,S+1,T)
    scores = mutual_information(px, py, s_lens, t_lens)
    return -jnp.sum(scores)                                        # reduction='sum'


def get_prune_ranges(s_lens, t_lens, T, S, r):
    # TODO(synk): k2.get_rnnt_prune_ranges derives ranges from px/py gradients;
    # approximated here with a monotonic linear alignment of width `r`.
    t = jnp.arange(T)[None, :]
    t_l = jnp.maximum(t_lens[:, None], 1)
    s_l = s_lens[:, None]
    start = jnp.floor((t * s_l) / t_l).astype(jnp.int32) - (r // 2)
    hi = jnp.maximum(s_l + 1 - r, 0)
    start = jnp.clip(start, 0, hi)
    ranges = start[:, :, None] + jnp.arange(r, dtype=jnp.int32)[None, None, :]
    return jnp.clip(ranges, 0, S).astype(jnp.int32)


def pruned_rnnt_loss(px_pr, py_pr, ranges, S, s_lens, t_lens):
    """px_pr/py_pr: (B,T,R) already-normalized log-probs from the joiner."""
    B, T, R = px_pr.shape
    b_idx = jnp.arange(B)[:, None, None]
    t_idx = jnp.arange(T)[None, :, None]
    px_full = jnp.full((B, T, S + 1), NEG_INF, jnp.float32
                       ).at[b_idx, t_idx, ranges].set(px_pr)
    py_full = jnp.full((B, T, S + 1), NEG_INF, jnp.float32
                       ).at[b_idx, t_idx, ranges].set(py_pr)

    px = jnp.transpose(px_full[:, :, :S], (0, 2, 1))               # (B,S,T)
    px = jnp.concatenate([px, jnp.full((B, S, 1), NEG_INF, jnp.float32)],
                         axis=2)                                   # (B,S,T+1)
    px = px.at[jnp.arange(B)[:, None], jnp.arange(S)[None, :],
               t_lens[:, None]].set(NEG_INF)
    py = jnp.transpose(py_full, (0, 2, 1))                         # (B,S+1,T)
    scores = mutual_information(px, py, s_lens, t_lens)
    return -jnp.sum(scores)


# --------------------------------------------------------------------------
# Transducer.forward
# --------------------------------------------------------------------------
def transducer_forward(params, x, x_lens, y_common, y_common_lens,
                       y_rich, y_rich_lens, *, prune_range, blank_id):
    N, T, _ = x.shape
    encoder_out, x_lens = encoder_forward(params["encoder"], x, x_lens)
    enc_dim = encoder_out.shape[-1]
    vocab = params["simple_am_w"].shape[1]

    def get_loss(y_padded, y_lens, dec_params, joiner_params):
        S = y_padded.shape[1]
        mask = jnp.arange(S)[None, :] < y_lens[:, None]
        symbols = jnp.where(mask, y_padded, 0).astype(jnp.int32)        # y.pad(0)
        sos_body = jnp.where(mask, y_padded, blank_id).astype(jnp.int32)
        sos_y_padded = jnp.concatenate(
            [jnp.full((N, 1), blank_id, jnp.int32), sos_body], axis=1)  # (N,S+1)

        decoder_out = decoder_forward(dec_params, sos_y_padded)         # (N,S+1,D)
        dec_dim = decoder_out.shape[-1]
        join_dim = joiner_params["enc_w"].shape[1]

        # Fused projections: each activation matrix is read from HBM once and
        # produces both the simple-loss logits and the joiner projection.
        lm_w = jnp.concatenate([params["simple_lm_w"],
                                joiner_params["dec_w"]], axis=1)
        lm_b = jnp.concatenate([params["simple_lm_b"],
                                joiner_params["dec_b"]], axis=0)
        dec_proj = pallas_linear(decoder_out.reshape(-1, dec_dim), lm_w, lm_b)
        lm = dec_proj[:, :vocab].reshape(N, S + 1, vocab)
        lm_p = dec_proj[:, vocab:].reshape(N, S + 1, join_dim)

        am_w = jnp.concatenate([params["simple_am_w"],
                                joiner_params["enc_w"]], axis=1)
        am_b = jnp.concatenate([params["simple_am_b"],
                                joiner_params["enc_b"]], axis=0)
        enc_proj = pallas_linear(encoder_out.reshape(-1, enc_dim), am_w, am_b)
        am = enc_proj[:, :vocab].reshape(N, T, vocab)
        am_p = enc_proj[:, vocab:].reshape(N, T, join_dim)

        simple_loss = simple_rnnt_loss(am, lm, symbols, blank_id,
                                       y_lens, x_lens)

        ranges = get_prune_ranges(y_lens, x_lens, T, S, prune_range)    # (N,T,R)
        sym_ext = jnp.concatenate(
            [symbols, jnp.full((N, 1), blank_id, symbols.dtype)], axis=1)
        pruned_syms = jax.vmap(lambda s, rg: s[rg])(sym_ext, ranges)    # (N,T,R)
        # TODO(synk): gathering the pruned lm rows inside the joiner kernel via
        # scalar-prefetched ranges would avoid materialising this bf16 tensor.
        lm_pruned = jax.vmap(lambda lmp, rg: lmp[rg.T])(
            lm_p.astype(jnp.bfloat16), ranges)                          # (N,R,T,J)

        px_pr, py_pr = pallas_joiner(am_p, lm_pruned, pruned_syms,
                                     joiner_params["out_w"],
                                     joiner_params["out_b"], blank_id)
        pruned_loss = pruned_rnnt_loss(px_pr, py_pr, ranges, S,
                                       y_lens, x_lens)
        return simple_loss, pruned_loss

    sl_common, prl_common = get_loss(y_common, y_common_lens,
                                     params["decoder_common"],
                                     params["joiner_common"])
    sl_rich, prl_rich = get_loss(y_rich, y_rich_lens,
                                 params["decoder_rich"],
                                 params["joiner_rich"])
    # TODO(synk): CTC branch is mentioned in the docstring but not computed in
    # this module's forward; nothing to translate.
    return sl_common, prl_common, sl_rich, prl_rich


# --------------------------------------------------------------------------
# Deterministic parameter init
# --------------------------------------------------------------------------
def init_params(key, feat_dim, enc_dim, dec_dim, join_dim, vocab):
    keys = jax.random.split(key, 24)

    def nrm(k, shape, scale=0.1):
        return scale * jax.random.normal(k, shape, jnp.float32)

    def dec(k0, k1):
        return {"embedding": nrm(k0, (vocab, dec_dim)),
                "conv_w": nrm(k1, (2 * dec_dim, dec_dim)),
                "conv_b": jnp.zeros((dec_dim,), jnp.float32)}

    def joiner(ks):
        return {"enc_w": nrm(ks[0], (enc_dim, join_dim)),
                "enc_b": nrm(ks[1], (join_dim,)),
                "dec_w": nrm(ks[2], (dec_dim, join_dim)),
                "dec_b": nrm(ks[3], (join_dim,)),
                "out_w": nrm(ks[4], (join_dim, vocab)),
                "out_b": nrm(ks[5], (vocab,))}

    return {
        "encoder": {"w": nrm(keys[0], (feat_dim, enc_dim)),
                    "b": nrm(keys[1], (enc_dim,))},
        # ScaledLinear scales folded into the weights at init time.
        "simple_am_w": nrm(keys[2], (enc_dim, vocab)),
        "simple_am_b": nrm(keys[3], (vocab,)),
        "simple_lm_w": nrm(keys[4], (dec_dim, vocab)),
        "simple_lm_b": nrm(keys[5], (vocab,)),
        "decoder_common": dec(keys[6], keys[7]),
        "decoder_rich": dec(keys[8], keys[9]),
        "joiner_common": joiner(keys[10:16]),
        "joiner_rich": joiner(keys[16:22]),
    }


if __name__ == "__main__":
    N, T, FEAT = 2, 8, 16
    ENC, DEC, JOIN, VOCAB = 32, 32, 32, 16
    S = 4
    PRUNE_RANGE = 3
    BLANK_ID = 0

    key = jax.random.PRNGKey(0)
    kx, ky1, ky2, kp = jax.random.split(key, 4)
    x = jax.random.normal(kx, (N, T, FEAT), jnp.float32)
    x_lens = jnp.array([8, 6], jnp.int32)
    y_common = jax.random.randint(ky1, (N, S), 1, VOCAB, dtype=jnp.int32)
    y_common_lens = jnp.array([4, 3], jnp.int32)
    y_rich = jax.random.randint(ky2, (N, S), 1, VOCAB, dtype=jnp.int32)
    y_rich_lens = jnp.array([4, 2], jnp.int32)

    params = init_params(kp, FEAT, ENC, DEC, JOIN, VOCAB)

    fwd = jax.jit(functools.partial(transducer_forward,
                                    prune_range=PRUNE_RANGE,
                                    blank_id=BLANK_ID))
    losses = fwd(params, x, x_lens, y_common, y_common_lens,
                 y_rich, y_rich_lens)
    losses = jax.block_until_ready(losses)
    assert len(losses) == 4
    assert all(bool(jnp.isfinite(l)) for l in losses), losses
    print("KERNEL_OK")
</pallas_src>

<mosaic_0001>
module attributes {stable_mosaic.version = 11 : i64} {
  func.func @_linear_kernel(%arg0: i32, %arg1: memref<16x64xf32, #tpu.memory_space<vmem>>, %arg2: memref<64x128xbf16, #tpu.memory_space<vmem>>, %arg3: memref<1x128xf32, #tpu.memory_space<vmem>>, %arg4: memref<16x128xbf16, #tpu.memory_space<vmem>>) attributes {dimension_semantics = [#tpu.dimension_semantics<parallel>], iteration_bounds = array<i64: 1>, scalar_prefetch = 0 : i64, scratch_operands = 0 : i64, tpu.core_type = #tpu.core_type<tc>, window_params = [{transform_indices = @transform_0, window_bounds = array<i64: 16, 64>}, {pipeline_mode = #tpu.pipeline_mode<synchronous>, transform_indices = @transform_1, window_bounds = array<i64: 64, 128>}, {pipeline_mode = #tpu.pipeline_mode<synchronous>, transform_indices = @transform_2, window_bounds = array<i64: 1, 128>}, {transform_indices = @transform_3, window_bounds = array<i64: 16, 128>}]} {
    %c0 = arith.constant 0 : index
    %c0_0 = arith.constant 0 : index
    %0 = vector.load %arg1[%c0, %c0_0] : memref<16x64xf32, #tpu.memory_space<vmem>>, vector<16x64xf32>
    %1 = arith.truncf %0 : vector<16x64xf32> to vector<16x64xbf16>
    %c0_1 = arith.constant 0 : index
    %c0_2 = arith.constant 0 : index
    %2 = vector.load %arg2[%c0_1, %c0_2] : memref<64x128xbf16, #tpu.memory_space<vmem>>, vector<64x128xbf16>
    %cst = arith.constant dense<0.000000e+00> : vector<16x128xf32>
    %3 = tpu.matmul %1, %2, %cst {dimension_numbers = #tpu.dot_dimension_numbers<[1], [0], [0], [1], [0, 0, 1, 1], [], []>} : vector<16x64xbf16>, vector<64x128xbf16>, vector<16x128xf32> -> vector<16x128xf32>
    %c0_3 = arith.constant 0 : index
    %c0_4 = arith.constant 0 : index
    %4 = vector.load %arg3[%c0_3, %c0_4] : memref<1x128xf32, #tpu.memory_space<vmem>>, vector<1x128xf32>
    %5 = vector.broadcast %4 : vector<1x128xf32> to vector<16x128xf32>
    %6 = arith.addf %3, %5 : vector<16x128xf32>
    %cst_5 = arith.constant 0.000000e+00 : f32
    %7 = vector.broadcast %cst_5 : f32 to vector<16x128xf32>
    %8 = arith.maximumf %6, %7 : vector<16x128xf32>
    %9 = arith.truncf %8 : vector<16x128xf32> to vector<16x128xbf16>
    %c0_6 = arith.constant 0 : index
    %c0_7 = arith.constant 0 : index
    %10 = vector.load %arg4[%c0_6, %c0_7] : memref<16x128xbf16, #tpu.memory_space<vmem>>, vector<16x128xbf16>
    tpu.vector_store %arg4[%c0_6, %c0_7], %9 {strides = array<i32>} : memref<16x128xbf16, #tpu.memory_space<vmem>>, vector<16x128xbf16>,
    return
  }
  func.func @transform_0(%arg0: i32) -> (i32, i32) {
    %c0_i32 = arith.constant 0 : i32
    %c0_i32_0 = arith.constant 0 : i32
    return %arg0, %c0_i32 : i32, i32
  }
  func.func @transform_1(%arg0: i32) -> (i32, i32) {
    %c0_i32 = arith.constant 0 : i32
    %c0_i32_0 = arith.constant 0 : i32
    %c0_i32_1 = arith.constant 0 : i32
    return %c0_i32, %c0_i32_0 : i32, i32
  }
  func.func @transform_2(%arg0: i32) -> (i32, i32) {
    %c0_i32 = arith.constant 0 : i32
    %c0_i32_0 = arith.constant 0 : i32
    %c0_i32_1 = arith.constant 0 : i32
    return %c0_i32, %c0_i32_0 : i32, i32
  }
  func.func @transform_3(%arg0: i32) -> (i32, i32) {
    %c0_i32 = arith.constant 0 : i32
    %c0_i32_0 = arith.constant 0 : i32
    return %arg0, %c0_i32 : i32, i32
  }
}

module attributes {stable_mosaic.version = 11 : i64} {
  func.func @_linear_kernel(%arg0: i32, %arg1: memref<16x32xbf16, #tpu.memory_space<vmem>>, %arg2: memref<32x128xbf16, #tpu.memory_space<vmem>>, %arg3: memref<1x128xf32, #tpu.memory_space<vmem>>, %arg4: memref<16x128xf32, #tpu.memory_space<vmem>>) attributes {dimension_semantics = [#tpu.dimension_semantics<parallel>], iteration_bounds = array<i64: 1>, scalar_prefetch = 0 : i64, scratch_operands = 0 : i64, tpu.core_type = #tpu.core_type<tc>, window_params = [{transform_indices = @transform_0, window_bounds = array<i64: 16, 32>}, {pipeline_mode = #tpu.pipeline_mode<synchronous>, transform_indices = @transform_1, window_bounds = array<i64: 32, 128>}, {pipeline_mode = #tpu.pipeline_mode<synchronous>, transform_indices = @transform_2, window_bounds = array<i64: 1, 128>}, {transform_indices = @transform_3, window_bounds = array<i64: 16, 128>}]} {
    %c0 = arith.constant 0 : index
    %c0_0 = arith.constant 0 : index
    %0 = vector.load %arg1[%c0, %c0_0] : memref<16x32xbf16, #tpu.memory_space<vmem>>, vector<16x32xbf16>
    %c0_1 = arith.constant 0 : index
    %c0_2 = arith.constant 0 : index
    %1 = vector.load %arg2[%c0_1, %c0_2] : memref<32x128xbf16, #tpu.memory_space<vmem>>, vector<32x128xbf16>
    %cst = arith.constant dense<0.000000e+00> : vector<16x128xf32>
    %2 = tpu.matmul %0, %1, %cst {dimension_numbers = #tpu.dot_dimension_numbers<[1], [0], [0], [1], [0, 0, 1, 1], [], []>} : vector<16x32xbf16>, vector<32x128xbf16>, vector<16x128xf32> -> vector<16x128xf32>
    %c0_3 = arith.constant 0 : index
    %c0_4 = arith.constant 0 : index
    %3 = vector.load %arg3[%c0_3, %c0_4] : memref<1x128xf32, #tpu.memory_space<vmem>>, vector<1x128xf32>
    %4 = vector.broadcast %3 : vector<1x128xf32> to vector<16x128xf32>
    %5 = arith.addf %2, %4 : vector<16x128xf32>
    %c0_5 = arith.constant 0 : index
    %c0_6 = arith.constant 0 : index
    %6 = vector.load %arg4[%c0_5, %c0_6] : memref<16x128xf32, #tpu.memory_space<vmem>>, vector<16x128xf32>
    tpu.vector_store %arg4[%c0_5, %c0_6], %5 {strides = array<i32>} : memref<16x128xf32, #tpu.memory_space<vmem>>, vector<16x128xf32>,
    return
  }
  func.func @transform_0(%arg0: i32) -> (i32, i32) {
    %c0_i32 = arith.constant 0 : i32
    %c0_i32_0 = arith.constant 0 : i32
    return %arg0, %c0_i32 : i32, i32
  }
  func.func @transform_1(%arg0: i32) -> (i32, i32) {
    %c0_i32 = arith.constant 0 : i32
    %c0_i32_0 = arith.constant 0 : i32
    %c0_i32_1 = arith.constant 0 : i32
    return %c0_i32, %c0_i32_0 : i32, i32
  }
  func.func @transform_2(%arg0: i32) -> (i32, i32) {
    %c0_i32 = arith.constant 0 : i32
    %c0_i32_0 = arith.constant 0 : i32
    %c0_i32_1 = arith.constant 0 : i32
    return %c0_i32, %c0_i32_0 : i32, i32
  }
  func.func @transform_3(%arg0: i32) -> (i32, i32) {
    %c0_i32 = arith.constant 0 : i32
    %c0_i32_0 = arith.constant 0 : i32
    return %arg0, %c0_i32 : i32, i32
  }
}

module attributes {stable_mosaic.version = 11 : i64} {
  func.func @_linear_kernel(%arg0: i32, %arg1: memref<16x16xf32, #tpu.memory_space<vmem>>, %arg2: memref<16x128xbf16, #tpu.memory_space<vmem>>, %arg3: memref<1x128xf32, #tpu.memory_space<vmem>>, %arg4: memref<16x128xbf16, #tpu.memory_space<vmem>>) attributes {dimension_semantics = [#tpu.dimension_semantics<parallel>], iteration_bounds = array<i64: 1>, scalar_prefetch = 0 : i64, scratch_operands = 0 : i64, tpu.core_type = #tpu.core_type<tc>, window_params = [{transform_indices = @transform_0, window_bounds = array<i64: 16, 16>}, {pipeline_mode = #tpu.pipeline_mode<synchronous>, transform_indices = @transform_1, window_bounds = array<i64: 16, 128>}, {pipeline_mode = #tpu.pipeline_mode<synchronous>, transform_indices = @transform_2, window_bounds = array<i64: 1, 128>}, {transform_indices = @transform_3, window_bounds = array<i64: 16, 128>}]} {
    %c0 = arith.constant 0 : index
    %c0_0 = arith.constant 0 : index
    %0 = vector.load %arg1[%c0, %c0_0] : memref<16x16xf32, #tpu.memory_space<vmem>>, vector<16x16xf32>
    %1 = arith.truncf %0 : vector<16x16xf32> to vector<16x16xbf16>
    %c0_1 = arith.constant 0 : index
    %c0_2 = arith.constant 0 : index
    %2 = vector.load %arg2[%c0_1, %c0_2] : memref<16x128xbf16, #tpu.memory_space<vmem>>, vector<16x128xbf16>
    %cst = arith.constant dense<0.000000e+00> : vector<16x128xf32>
    %3 = tpu.matmul %1, %2, %cst {dimension_numbers = #tpu.dot_dimension_numbers<[1], [0], [0], [1], [0, 0, 1, 1], [], []>} : vector<16x16xbf16>, vector<16x128xbf16>, vector<16x128xf32> -> vector<16x128xf32>
    %c0_3 = arith.constant 0 : index
    %c0_4 = arith.constant 0 : index
    %4 = vector.load %arg3[%c0_3, %c0_4] : memref<1x128xf32, #tpu.memory_space<vmem>>, vector<1x128xf32>
    %5 = vector.broadcast %4 : vector<1x128xf32> to vector<16x128xf32>
    %6 = arith.addf %3, %5 : vector<16x128xf32>
    %7 = math.tanh %6 : vector<16x128xf32>
    %8 = arith.truncf %7 : vector<16x128xf32> to vector<16x128xbf16>
    %c0_5 = arith.constant 0 : index
    %c0_6 = arith.constant 0 : index
    %9 = vector.load %arg4[%c0_5, %c0_6] : memref<16x128xbf16, #tpu.memory_space<vmem>>, vector<16x128xbf16>
    tpu.vector_store %arg4[%c0_5, %c0_6], %8 {strides = array<i32>} : memref<16x128xbf16, #tpu.memory_space<vmem>>, vector<16x128xbf16>,
    return
  }
  func.func @transform_0(%arg0: i32) -> (i32, i32) {
    %c0_i32 = arith.constant 0 : i32
    %c0_i32_0 = arith.constant 0 : i32
    return %arg0, %c0_i32 : i32, i32
  }
  func.func @transform_1(%arg0: i32) -> (i32, i32) {
    %c0_i32 = arith.constant 0 : i32
    %c0_i32_0 = arith.constant 0 : i32
    %c0_i32_1 = arith.constant 0 : i32
    return %c0_i32, %c0_i32_0 : i32, i32
  }
  func.func @transform_2(%arg0: i32) -> (i32, i32) {
    %c0_i32 = arith.constant 0 : i32
    %c0_i32_0 = arith.constant 0 : i32
    %c0_i32_1 = arith.constant 0 : i32
    return %c0_i32, %c0_i32_0 : i32, i32
  }
  func.func @transform_3(%arg0: i32) -> (i32, i32) {
    %c0_i32 = arith.constant 0 : i32
    %c0_i32_0 = arith.constant 0 : i32
    return %arg0, %c0_i32 : i32, i32
  }
}

module attributes {stable_mosaic.version = 11 : i64} {
  func.func @_trivial_joint_normalizer_kernel(%arg0: i32, %arg1: i32, %arg2: memref<1x8x16xf32, #tpu.memory_space<vmem>>, %arg3: memref<1x16x128xf32, #tpu.memory_space<vmem>>, %arg4: memref<1x8x128xf32, #tpu.memory_space<vmem>>) attributes {dimension_semantics = [#tpu.dimension_semantics<parallel>, #tpu.dimension_semantics<parallel>], iteration_bounds = array<i64: 2, 1>, scalar_prefetch = 0 : i64, scratch_operands = 0 : i64, tpu.core_type = #tpu.core_type<tc>, window_params = [{transform_indices = @transform_0, window_bounds = array<i64: 1, 8, 16>}, {transform_indices = @transform_1, window_bounds = array<i64: 1, 16, 128>}, {transform_indices = @transform_2, window_bounds = array<i64: 1, 8, 128>}]} {
    %c0 = arith.constant 0 : index
    %c0_0 = arith.constant 0 : index
    %c0_1 = arith.constant 0 : index
    %0 = vector.load %arg2[%c0, %c0_0, %c0_1] : memref<1x8x16xf32, #tpu.memory_space<vmem>>, vector<1x8x16xf32>
    %1 = vector.shape_cast %0 : vector<1x8x16xf32> to vector<8x16xf32>
    %c0_2 = arith.constant 0 : index
    %c0_3 = arith.constant 0 : index
    %c0_4 = arith.constant 0 : index
    %2 = vector.load %arg3[%c0_2, %c0_3, %c0_4] : memref<1x16x128xf32, #tpu.memory_space<vmem>>, vector<1x16x128xf32>
    %3 = vector.shape_cast %2 : vector<1x16x128xf32> to vector<16x128xf32>
    %cst = arith.constant dense<0xFF800000> : vector<8xf32>
    %4 = vector.multi_reduction <maximumf>, %1, %cst [1] : vector<8x16xf32> to vector<8xf32>
    %5 = vector.shape_cast %4 : vector<8xf32> to vector<8x1xf32>
    %cst_5 = arith.constant -1.000000e+30 : f32
    %6 = vector.broadcast %cst_5 : f32 to vector<8x1xf32>
    %7 = arith.maximumf %5, %6 : vector<8x1xf32>
    %cst_6 = arith.constant dense<0xFF800000> : vector<128xf32>
    %8 = vector.multi_reduction <maximumf>, %3, %cst_6 [0] : vector<16x128xf32> to vector<128xf32>
    %9 = vector.shape_cast %8 : vector<128xf32> to vector<1x128xf32>
    %cst_7 = arith.constant -1.000000e+30 : f32
    %10 = vector.broadcast %cst_7 : f32 to vector<1x128xf32>
    %11 = arith.maximumf %9, %10 : vector<1x128xf32>
    %12 = vector.broadcast %7 : vector<8x1xf32> to vector<8x16xf32>
    %13 = arith.subf %1, %12 : vector<8x16xf32>
    %14 = math.exp %13 : vector<8x16xf32>
    %15 = arith.truncf %14 : vector<8x16xf32> to vector<8x16xbf16>
    %16 = vector.broadcast %11 : vector<1x128xf32> to vector<16x128xf32>
    %17 = arith.subf %3, %16 : vector<16x128xf32>
    %18 = math.exp %17 : vector<16x128xf32>
    %19 = arith.truncf %18 : vector<16x128xf32> to vector<16x128xbf16>
    %cst_8 = arith.constant dense<0.000000e+00> : vector<8x128xf32>
    %20 = tpu.matmul %15, %19, %cst_8 {dimension_numbers = #tpu.dot_dimension_numbers<[1], [0], [0], [1], [0, 0, 1, 1], [], []>} : vector<8x16xbf16>, vector<16x128xbf16>, vector<8x128xf32> -> vector<8x128xf32>
    %cst_9 = arith.constant 1.000000e-30 : f32
    %21 = vector.broadcast %cst_9 : f32 to vector<8x128xf32>
    %22 = arith.maximumf %20, %21 : vector<8x128xf32>
    %23 = math.log %22 : vector<8x128xf32>
    %24 = vector.broadcast %7 : vector<8x1xf32> to vector<8x128xf32>
    %25 = arith.addf %23, %24 : vector<8x128xf32>
    %26 = vector.broadcast %11 : vector<1x128xf32> to vector<8x128xf32>
    %27 = arith.addf %25, %26 : vector<8x128xf32>
    %c0_10 = arith.constant 0 : index
    %c0_11 = arith.constant 0 : index
    %c0_12 = arith.constant 0 : index
    %28 = vector.load %arg4[%c0_10, %c0_11, %c0_12] : memref<1x8x128xf32, #tpu.memory_space<vmem>>, vector<1x8x128xf32>
    %29 = vector.shape_cast %28 : vector<1x8x128xf32> to vector<8x128xf32>
    %30 = vector.shape_cast %27 : vector<8x128xf32> to vector<1x8x128xf32>
    tpu.vector_store %arg4[%c0_10, %c0_11, %c0_12], %30 {strides = array<i32>} : memref<1x8x128xf32, #tpu.memory_space<vmem>>, vector<1x8x128xf32>,
    return
  }
  func.func @transform_0(%arg0: i32, %arg1: i32) -> (i32, i32, i32) {
    %c0_i32 = arith.constant 0 : i32
    %c0_i32_0 = arith.constant 0 : i32
    return %arg0, %arg1, %c0_i32 : i32, i32, i32
  }
  func.func @transform_1(%arg0: i32, %arg1: i32) -> (i32, i32, i32) {
    %c0_i32 = arith.constant 0 : i32
    %c0_i32_0 = arith.constant 0 : i32
    %c0_i32_1 = arith.constant 0 : i32
    return %arg0, %c0_i32, %c0_i32_0 : i32, i32, i32
  }
  func.func @transform_2(%arg0: i32, %arg1: i32) -> (i32, i32, i32) {
    %c0_i32 = arith.constant 0 : i32
    %c0_i32_0 = arith.constant 0 : i32
    return %arg0, %arg1, %c0_i32 : i32, i32, i32
  }
}

module attributes {stable_mosaic.version = 11 : i64} {
  func.func @_joiner_kernel(%arg0: i32, %arg1: i32, %arg2: memref<1x8x32xf32, #tpu.memory_space<vmem>>, %arg3: memref<1x3x8x32xbf16, #tpu.memory_space<vmem>>, %arg4: memref<1x8x3xi32, #tpu.memory_space<vmem>>, %arg5: memref<32x128xbf16, #tpu.memory_space<vmem>>, %arg6: memref<1x128xf32, #tpu.memory_space<vmem>>, %arg7: memref<1x8x3xf32, #tpu.memory_space<vmem>>, %arg8: memref<1x8x3xf32, #tpu.memory_space<vmem>>) attributes {dimension_semantics = [#tpu.dimension_semantics<parallel>, #tpu.dimension_semantics<parallel>], iteration_bounds = array<i64: 2, 1>, scalar_prefetch = 0 : i64, scratch_operands = 0 : i64, tpu.core_type = #tpu.core_type<tc>, window_params = [{transform_indices = @transform_0, window_bounds = array<i64: 1, 8, 32>}, {transform_indices = @transform_1, window_bounds = array<i64: 1, 3, 8, 32>}, {transform_indices = @transform_2, window_bounds = array<i64: 1, 8, 3>}, {pipeline_mode = #tpu.pipeline_mode<synchronous>, transform_indices = @transform_3, window_bounds = array<i64: 32, 128>}, {pipeline_mode = #tpu.pipeline_mode<synchronous>, transform_indices = @transform_4, window_bounds = array<i64: 1, 128>}, {transform_indices = @transform_5, window_bounds = array<i64: 1, 8, 3>}, {transform_indices = @transform_6, window_bounds = array<i64: 1, 8, 3>}]} {
    %c0 = arith.constant 0 : index
    %c0_0 = arith.constant 0 : index
    %c0_1 = arith.constant 0 : index
    %0 = vector.load %arg2[%c0, %c0_0, %c0_1] : memref<1x8x32xf32, #tpu.memory_space<vmem>>, vector<1x8x32xf32>
    %1 = vector.shape_cast %0 : vector<1x8x32xf32> to vector<8x32xf32>
    %2 = arith.truncf %1 : vector<8x32xf32> to vector<8x32xbf16>
    %c0_2 = arith.constant 0 : index
    %c0_3 = arith.constant 0 : index
    %c0_4 = arith.constant 0 : index
    %3 = vector.load %arg4[%c0_2, %c0_3, %c0_4] : memref<1x8x3xi32, #tpu.memory_space<vmem>>, vector<1x8x3xi32>
    %4 = vector.shape_cast %3 : vector<1x8x3xi32> to vector<8x3xi32>
    %c0_5 = arith.constant 0 : index
    %c0_6 = arith.constant 0 : index
    %5 = vector.load %arg5[%c0_5, %c0_6] : memref<32x128xbf16, #tpu.memory_space<vmem>>, vector<32x128xbf16>
    %c0_7 = arith.constant 0 : index
    %c0_8 = arith.constant 0 : index
    %6 = vector.load %arg6[%c0_7, %c0_8] : memref<1x128xf32, #tpu.memory_space<vmem>>, vector<1x128xf32>
    %7 = tpu.iota {dimensions = array<i32: 1>} : vector<8x128xi32>
    %c16_i32 = arith.constant 16 : i32
    %8 = vector.broadcast %c16_i32 : i32 to vector<8x128xi32>
    %9 = arith.cmpi slt, %7, %8 : vector<8x128xi32>
    %c0_9 = arith.constant 0 : index
    %c0_10 = arith.constant 0 : index
    %c0_11 = arith.constant 0 : index
    %c0_12 = arith.constant 0 : index
    %10 = vector.load %arg3[%c0_9, %c0_10, %c0_11, %c0_12] : memref<1x3x8x32xbf16, #tpu.memory_space<vmem>>, vector<1x1x8x32xbf16>
    %11 = vector.shape_cast %10 : vector<1x1x8x32xbf16> to vector<8x32xbf16>
    %12 = arith.addf %2, %11 : vector<8x32xbf16>
    %13 = math.tanh %12 : vector<8x32xbf16>
    %cst = arith.constant dense<0.000000e+00> : vector<8x128xf32>
    %14 = tpu.matmul %13, %5, %cst {dimension_numbers = #tpu.dot_dimension_numbers<[1], [0], [0], [1], [0, 0, 1, 1], [], []>} : vector<8x32xbf16>, vector<32x128xbf16>, vector<8x128xf32> -> vector<8x128xf32>
    %15 = vector.broadcast %6 : vector<1x128xf32> to vector<8x128xf32>
    %16 = arith.addf %14, %15 : vector<8x128xf32>
    %cst_13 = arith.constant -1.000000e+30 : f32
    %17 = vector.broadcast %cst_13 : f32 to vector<8x128xf32>
    %18 = arith.select %9, %16, %17 : vector<8x128xi1>, vector<8x128xf32>
    %cst_14 = arith.constant dense<0xFF800000> : vector<8xf32>
    %19 = vector.multi_reduction <maximumf>, %18, %cst_14 [1] : vector<8x128xf32> to vector<8xf32>
    %20 = vector.shape_cast %19 : vector<8xf32> to vector<8x1xf32>
    %21 = vector.broadcast %20 : vector<8x1xf32> to vector<8x128xf32>
    %22 = arith.subf %18, %21 : vector<8x128xf32>
    %23 = math.exp %22 : vector<8x128xf32>
    %cst_15 = arith.constant dense<0.000000e+00> : vector<8xf32>
    %24 = vector.multi_reduction <add>, %23, %cst_15 [1] : vector<8x128xf32> to vector<8xf32>
    %25 = vector.shape_cast %24 : vector<8xf32> to vector<8x1xf32>
    %26 = math.log %25 : vector<8x1xf32>
    %27 = arith.addf %20, %26 : vector<8x1xf32>
    %28 = vector.extract_strided_slice %4 {offsets = [0, 0], sizes = [8, 1], strides = [1, 1]} : vector<8x3xi32> to vector<8x1xi32>
    %29 = vector.broadcast %28 : vector<8x1xi32> to vector<8x128xi32>
    %30 = arith.cmpi eq, %7, %29 : vector<8x128xi32>
    %cst_16 = arith.constant 0.000000e+00 : f32
    %31 = vector.broadcast %cst_16 : f32 to vector<8x128xf32>
    %32 = arith.select %30, %18, %31 : vector<8x128xi1>, vector<8x128xf32>
    %cst_17 = arith.constant dense<0.000000e+00> : vector<8xf32>
    %33 = vector.multi_reduction <add>, %32, %cst_17 [1] : vector<8x128xf32> to vector<8xf32>
    %34 = vector.shape_cast %33 : vector<8xf32> to vector<8x1xf32>
    %c0_i32 = arith.constant 0 : i32
    %35 = vector.broadcast %c0_i32 : i32 to vector<8x128xi32>
    %36 = arith.cmpi eq, %7, %35 : vector<8x128xi32>
    %cst_18 = arith.constant 0.000000e+00 : f32
    %37 = vector.broadcast %cst_18 : f32 to vector<8x128xf32>
    %38 = arith.select %36, %18, %37 : vector<8x128xi1>, vector<8x128xf32>
    %cst_19 = arith.constant dense<0.000000e+00> : vector<8xf32>
    %39 = vector.multi_reduction <add>, %38, %cst_19 [1] : vector<8x128xf32> to vector<8xf32>
    %40 = vector.shape_cast %39 : vector<8xf32> to vector<8x1xf32>
    %41 = arith.subf %34, %27 : vector<8x1xf32>
    %42 = arith.subf %40, %27 : vector<8x1xf32>
    %c0_20 = arith.constant 0 : index
    %c1 = arith.constant 1 : index
    %c0_21 = arith.constant 0 : index
    %c0_22 = arith.constant 0 : index
    %43 = vector.load %arg3[%c0_20, %c1, %c0_21, %c0_22] : memref<1x3x8x32xbf16, #tpu.memory_space<vmem>>, vector<1x1x8x32xbf16>
    %44 = vector.shape_cast %43 : vector<1x1x8x32xbf16> to vector<8x32xbf16>
    %45 = arith.addf %2, %44 : vector<8x32xbf16>
    %46 = math.tanh %45 : vector<8x32xbf16>
    %cst_23 = arith.constant dense<0.000000e+00> : vector<8x128xf32>
    %47 = tpu.matmul %46, %5, %cst_23 {dimension_numbers = #tpu.dot_dimension_numbers<[1], [0], [0], [1], [0, 0, 1, 1], [], []>} : vector<8x32xbf16>, vector<32x128xbf16>, vector<8x128xf32> -> vector<8x128xf32>
    %48 = vector.broadcast %6 : vector<1x128xf32> to vector<8x128xf32>
    %49 = arith.addf %47, %48 : vector<8x128xf32>
    %cst_24 = arith.constant -1.000000e+30 : f32
    %50 = vector.broadcast %cst_24 : f32 to vector<8x128xf32>
    %51 = arith.select %9, %49, %50 : vector<8x128xi1>, vector<8x128xf32>
    %cst_25 = arith.constant dense<0xFF800000> : vector<8xf32>
    %52 = vector.multi_reduction <maximumf>, %51, %cst_25 [1] : vector<8x128xf32> to vector<8xf32>
    %53 = vector.shape_cast %52 : vector<8xf32> to vector<8x1xf32>
    %54 = vector.broadcast %53 : vector<8x1xf32> to vector<8x128xf32>
    %55 = arith.subf %51, %54 : vector<8x128xf32>
    %56 = math.exp %55 : vector<8x128xf32>
    %cst_26 = arith.constant dense<0.000000e+00> : vector<8xf32>
    %57 = vector.multi_reduction <add>, %56, %cst_26 [1] : vector<8x128xf32> to vector<8xf32>
    %58 = vector.shape_cast %57 : vector<8xf32> to vector<8x1xf32>
    %59 = math.log %58 : vector<8x1xf32>
    %60 = arith.addf %53, %59 : vector<8x1xf32>
    %61 = vector.extract_strided_slice %4 {offsets = [0, 1], sizes = [8, 1], strides = [1, 1]} : vector<8x3xi32> to vector<8x1xi32>
    %62 = vector.broadcast %61 : vector<8x1xi32> to vector<8x128xi32>
    %63 = arith.cmpi eq, %7, %62 : vector<8x128xi32>
    %cst_27 = arith.constant 0.000000e+00 : f32
    %64 = vector.broadcast %cst_27 : f32 to vector<8x128xf32>
    %65 = arith.select %63, %51, %64 : vector<8x128xi1>, vector<8x128xf32>
    %cst_28 = arith.constant dense<0.000000e+00> : vector<8xf32>
    %66 = vector.multi_reduction <add>, %65, %cst_28 [1] : vector<8x128xf32> to vector<8xf32>
    %67 = vector.shape_cast %66 : vector<8xf32> to vector<8x1xf32>
    %c0_i32_29 = arith.constant 0 : i32
    %68 = vector.broadcast %c0_i32_29 : i32 to vector<8x128xi32>
    %69 = arith.cmpi eq, %7, %68 : vector<8x128xi32>
    %cst_30 = arith.constant 0.000000e+00 : f32
    %70 = vector.broadcast %cst_30 : f32 to vector<8x128xf32>
    %71 = arith.select %69, %51, %70 : vector<8x128xi1>, vector<8x128xf32>
    %cst_31 = arith.constant dense<0.000000e+00> : vector<8xf32>
    %72 = vector.multi_reduction <add>, %71, %cst_31 [1] : vector<8x128xf32> to vector<8xf32>
    %73 = vector.shape_cast %72 : vector<8xf32> to vector<8x1xf32>
    %74 = arith.subf %67, %60 : vector<8x1xf32>
    %75 = arith.subf %73, %60 : vector<8x1xf32>
    %c0_32 = arith.constant 0 : index
    %c2 = arith.constant 2 : index
    %c0_33 = arith.constant 0 : index
    %c0_34 = arith.constant 0 : index
    %76 = vector.load %arg3[%c0_32, %c2, %c0_33, %c0_34] : memref<1x3x8x32xbf16, #tpu.memory_space<vmem>>, vector<1x1x8x32xbf16>
    %77 = vector.shape_cast %76 : vector<1x1x8x32xbf16> to vector<8x32xbf16>
    %78 = arith.addf %2, %77 : vector<8x32xbf16>
    %79 = math.tanh %78 : vector<8x32xbf16>
    %cst_35 = arith.constant dense<0.000000e+00> : vector<8x128xf32>
    %80 = tpu.matmul %79, %5, %cst_35 {dimension_numbers = #tpu.dot_dimension_numbers<[1], [0], [0], [1], [0, 0, 1, 1], [], []>} : vector<8x32xbf16>, vector<32x128xbf16>, vector<8x128xf32> -> vector<8x128xf32>
    %81 = vector.broadcast %6 : vector<1x128xf32> to vector<8x128xf32>
    %82 = arith.addf %80, %81 : vector<8x128xf32>
    %cst_36 = arith.constant -1.000000e+30 : f32
    %83 = vector.broadcast %cst_36 : f32 to vector<8x128xf32>
    %84 = arith.select %9, %82, %83 : vector<8x128xi1>, vector<8x128xf32>
    %cst_37 = arith.constant dense<0xFF800000> : vector<8xf32>
    %85 = vector.multi_reduction <maximumf>, %84, %cst_37 [1] : vector<8x128xf32> to vector<8xf32>
    %86 = vector.shape_cast %85 : vector<8xf32> to vector<8x1xf32>
    %87 = vector.broadcast %86 : vector<8x1xf32> to vector<8x128xf32>
    %88 = arith.subf %84, %87 : vector<8x128xf32>
    %89 = math.exp %88 : vector<8x128xf32>
    %cst_38 = arith.constant dense<0.000000e+00> : vector<8xf32>
    %90 = vector.multi_reduction <add>, %89, %cst_38 [1] : vector<8x128xf32> to vector<8xf32>
    %91 = vector.shape_cast %90 : vector<8xf32> to vector<8x1xf32>
    %92 = math.log %91 : vector<8x1xf32>
    %93 = arith.addf %86, %92 : vector<8x1xf32>
    %94 = vector.extract_strided_slice %4 {offsets = [0, 2], sizes = [8, 1], strides = [1, 1]} : vector<8x3xi32> to vector<8x1xi32>
    %95 = vector.broadcast %94 : vector<8x1xi32> to vector<8x128xi32>
    %96 = arith.cmpi eq, %7, %95 : vector<8x128xi32>
    %cst_39 = arith.constant 0.000000e+00 : f32
    %97 = vector.broadcast %cst_39 : f32 to vector<8x128xf32>
    %98 = arith.select %96, %84, %97 : vector<8x128xi1>, vector<8x128xf32>
    %cst_40 = arith.constant dense<0.000000e+00> : vector<8xf32>
    %99 = vector.multi_reduction <add>, %98, %cst_40 [1] : vector<8x128xf32> to vector<8xf32>
    %100 = vector.shape_cast %99 : vector<8xf32> to vector<8x1xf32>
    %c0_i32_41 = arith.constant 0 : i32
    %101 = vector.broadcast %c0_i32_41 : i32 to vector<8x128xi32>
    %102 = arith.cmpi eq, %7, %101 : vector<8x128xi32>
    %cst_42 = arith.constant 0.000000e+00 : f32
    %103 = vector.broadcast %cst_42 : f32 to vector<8x128xf32>
    %104 = arith.select %102, %84, %103 : vector<8x128xi1>, vector<8x128xf32>
    %cst_43 = arith.constant dense<0.000000e+00> : vector<8xf32>
    %105 = vector.multi_reduction <add>, %104, %cst_43 [1] : vector<8x128xf32> to vector<8xf32>
    %106 = vector.shape_cast %105 : vector<8xf32> to vector<8x1xf32>
    %107 = arith.subf %100, %93 : vector<8x1xf32>
    %108 = arith.subf %106, %93 : vector<8x1xf32>
    %109 = tpu.concatenate %41, %74, %107 in 1 : vector<8x1xf32>, vector<8x1xf32>, vector<8x1xf32> -> vector<8x3xf32>
    %c0_44 = arith.constant 0 : index
    %c0_45 = arith.constant 0 : index
    %c0_46 = arith.constant 0 : index
    %110 = vector.load %arg7[%c0_44, %c0_45, %c0_46] : memref<1x8x3xf32, #tpu.memory_space<vmem>>, vector<1x8x3xf32>
    %111 = vector.shape_cast %110 : vector<1x8x3xf32> to vector<8x3xf32>
    %112 = vector.shape_cast %109 : vector<8x3xf32> to vector<1x8x3xf32>
    tpu.vector_store %arg7[%c0_44, %c0_45, %c0_46], %112 {strides = array<i32>} : memref<1x8x3xf32, #tpu.memory_space<vmem>>, vector<1x8x3xf32>,
    %113 = tpu.concatenate %42, %75, %108 in 1 : vector<8x1xf32>, vector<8x1xf32>, vector<8x1xf32> -> vector<8x3xf32>
    %c0_47 = arith.constant 0 : index
    %c0_48 = arith.constant 0 : index
    %c0_49 = arith.constant 0 : index
    %114 = vector.load %arg8[%c0_47, %c0_48, %c0_49] : memref<1x8x3xf32, #tpu.memory_space<vmem>>, vector<1x8x3xf32>
    %115 = vector.shape_cast %114 : vector<1x8x3xf32> to vector<8x3xf32>
    %116 = vector.shape_cast %113 : vector<8x3xf32> to vector<1x8x3xf32>
    tpu.vector_store %arg8[%c0_47, %c0_48, %c0_49], %116 {strides = array<i32>} : memref<1x8x3xf32, #tpu.memory_space<vmem>>, vector<1x8x3xf32>,
    return
  }
  func.func @transform_0(%arg0: i32, %arg1: i32) -> (i32, i32, i32) {
    %c0_i32 = arith.constant 0 : i32
    %c0_i32_0 = arith.constant 0 : i32
    return %arg0, %arg1, %c0_i32 : i32, i32, i32
  }
  func.func @transform_1(%arg0: i32, %arg1: i32) -> (i32, i32, i32, i32) {
    %c0_i32 = arith.constant 0 : i32
    %c0_i32_0 = arith.constant 0 : i32
    %c0_i32_1 = arith.constant 0 : i32
    return %arg0, %c0_i32, %arg1, %c0_i32_0 : i32, i32, i32, i32
  }
  func.func @transform_2(%arg0: i32, %arg1: i32) -> (i32, i32, i32) {
    %c0_i32 = arith.constant 0 : i32
    %c0_i32_0 = arith.constant 0 : i32
    return %arg0, %arg1, %c0_i32 : i32, i32, i32
  }
  func.func @transform_3(%arg0: i32, %arg1: i32) -> (i32, i32) {
    %c0_i32 = arith.constant 0 : i32
    %c0_i32_0 = arith.constant 0 : i32
    %c0_i32_1 = arith.constant 0 : i32
    return %c0_i32, %c0_i32_0 : i32, i32
  }
  func.func @transform_4(%arg0: i32, %arg1: i32) -> (i32, i32) {
    %c0_i32 = arith.constant 0 : i32
    %c0_i32_0 = arith.constant 0 : i32
    %c0_i32_1 = arith.constant 0 : i32
    return %c0_i32, %c0_i32_0 : i32, i32
  }
  func.func @transform_5(%arg0: i32, %arg1: i32) -> (i32, i32, i32) {
    %c0_i32 = arith.constant 0 : i32
    %c0_i32_0 = arith.constant 0 : i32
    return %arg0, %arg1, %c0_i32 : i32, i32, i32
  }
  func.func @transform_6(%arg0: i32, %arg1: i32) -> (i32, i32, i32) {
    %c0_i32 = arith.constant 0 : i32
    %c0_i32_0 = arith.constant 0 : i32
    return %arg0, %arg1, %c0_i32 : i32, i32, i32
  }
}

module attributes {stable_mosaic.version = 11 : i64} {
  func.func @_mi_alpha_kernel(%arg0: i32, %arg1: i32, %arg2: memref<9x8x128xf32, #tpu.memory_space<vmem>>, %arg3: memref<9x8x128xf32, #tpu.memory_space<vmem>>, %arg4: memref<8x1xi32, #tpu.memory_space<vmem>>, %arg5: memref<8x128xf32, #tpu.memory_space<vmem>>, %arg6: memref<8x128xf32, #tpu.memory_space<vmem>>, %arg7: memref<8x128xf32, #tpu.memory_space<vmem>>) attributes {dimension_semantics = [#tpu.dimension_semantics<parallel>, #tpu.dimension_semantics<arbitrary>], iteration_bounds = array<i64: 1, 1>, scalar_prefetch = 0 : i64, scratch_operands = 1 : i64, tpu.core_type = #tpu.core_type<tc>, window_params = [{transform_indices = @transform_0, window_bounds = array<i64: 9, 8, 128>}, {transform_indices = @transform_1, window_bounds = array<i64: 9, 8, 128>}, {transform_indices = @transform_2, window_bounds = array<i64: 8, 1>}, {transform_indices = @transform_3, window_bounds = array<i64: 8, 128>}, {transform_indices = @transform_4, window_bounds = array<i64: 8, 128>}]} {
    %0 = tpu.iota {dimensions = array<i32: 1>} : vector<8x128xi32>
    %c0_i32 = arith.constant 0 : i32
    %1 = arith.cmpi eq, %arg1, %c0_i32 : i32
    %2 = arith.extui %1 : i1 to i32
    %c0_i32_0 = arith.constant 0 : i32
    %3 = arith.cmpi ne, %2, %c0_i32_0 : i32
    scf.if %3 {
      %cst_10 = arith.constant 0.000000e+00 : f32
      %13 = vector.broadcast %cst_10 : f32 to vector<8x128xf32>
      %c0_11 = arith.constant 0 : index
      %c0_12 = arith.constant 0 : index
      %14 = vector.load %arg7[%c0_11, %c0_12] : memref<8x128xf32, #tpu.memory_space<vmem>>, vector<8x128xf32>
      tpu.vector_store %arg7[%c0_11, %c0_12], %13 {strides = array<i32>} : memref<8x128xf32, #tpu.memory_space<vmem>>, vector<8x128xf32>,
      %cst_13 = arith.constant 0.000000e+00 : f32
      %15 = vector.broadcast %cst_13 : f32 to vector<8x128xf32>
      %c0_14 = arith.constant 0 : index
      %c0_15 = arith.constant 0 : index
      %16 = vector.load %arg6[%c0_14, %c0_15] : memref<8x128xf32, #tpu.memory_space<vmem>>, vector<8x128xf32>
      tpu.vector_store %arg6[%c0_14, %c0_15], %15 {strides = array<i32>} : memref<8x128xf32, #tpu.memory_space<vmem>>, vector<8x128xf32>,
    } else {
    }
    %c0 = arith.constant 0 : index
    %c0_1 = arith.constant 0 : index
    %4 = vector.load %arg4[%c0, %c0_1] : memref<8x1xi32, #tpu.memory_space<vmem>>, vector<8x1xi32>
    %c0_2 = arith.constant 0 : index
    %c0_3 = arith.constant 0 : index
    %5 = vector.load %arg5[%c0_2, %c0_3] : memref<8x128xf32, #tpu.memory_space<vmem>>, vector<8x128xf32>
    %c0_i32_4 = arith.constant 0 : i32
    %c9_i32 = arith.constant 9 : i32
    %6 = arith.addi %c0_i32_4, %c9_i32 : i32
    %c1_i32 = arith.constant 1 : i32
    scf.for %arg8 = %c0_i32_4 to %6 step %c1_i32  : i32 {
      %c9_i32_10 = arith.constant 9 : i32
      %13 = arith.muli %arg1, %c9_i32_10 : i32
      %14 = arith.addi %13, %arg8 : i32
      %15 = arith.index_cast %arg8 : i32 to index
      %c0_11 = arith.constant 0 : index
      %c0_12 = arith.constant 0 : index
      %16 = vector.load %arg2[%15, %c0_11, %c0_12] : memref<9x8x128xf32, #tpu.memory_space<vmem>>, vector<1x8x128xf32>
      %17 = vector.shape_cast %16 : vector<1x8x128xf32> to vector<8x128xf32>
      %c0_13 = arith.constant 0 : index
      %c0_14 = arith.constant 0 : index
      %18 = vector.load %arg7[%c0_13, %c0_14] : memref<8x128xf32, #tpu.memory_space<vmem>>, vector<8x128xf32>
      %19 = arith.index_cast %arg8 : i32 to index
      %c0_15 = arith.constant 0 : index
      %c0_16 = arith.constant 0 : index
      %20 = vector.load %arg3[%19, %c0_15, %c0_16] : memref<9x8x128xf32, #tpu.memory_space<vmem>>, vector<1x8x128xf32>
      %21 = vector.shape_cast %20 : vector<1x8x128xf32> to vector<8x128xf32>
      %22 = arith.addf %18, %21 : vector<8x128xf32>
      %c1_i32_17 = arith.constant 1 : i32
      %23 = vector.broadcast %c1_i32_17 : i32 to vector<8x128xi32>
      %24 = arith.cmpi slt, %0, %23 : vector<8x128xi32>
      %c1_i32_18 = arith.constant 1 : i32
      %25 = tpu.dynamic_rotate %22 by %c1_i32_18 dim 1 : vector<8x128xf32>, i32 -> vector<8x128xf32>
      %cst_19 = arith.constant -1.000000e+30 : f32
      %26 = vector.broadcast %cst_19 : f32 to vector<8x128xf32>
      %27 = arith.select %24, %26, %25 : vector<8x128xi1>, vector<8x128xf32>
      %c1_i32_20 = arith.constant 1 : i32
      %28 = vector.broadcast %c1_i32_20 : i32 to vector<8x128xi32>
      %29 = arith.cmpi slt, %0, %28 : vector<8x128xi32>
      %c1_i32_21 = arith.constant 1 : i32
      %30 = tpu.dynamic_rotate %17 by %c1_i32_21 dim 1 : vector<8x128xf32>, i32 -> vector<8x128xf32>
      %cst_22 = arith.constant 0.000000e+00 : f32
      %31 = vector.broadcast %cst_22 : f32 to vector<8x128xf32>
      %32 = arith.select %29, %31, %30 : vector<8x128xi1>, vector<8x128xf32>
      %33 = arith.addf %27, %17 : vector<8x128xf32>
      %34 = arith.maximumf %22, %33 : vector<8x128xf32>
      %35 = arith.subf %22, %33 : vector<8x128xf32>
      %36 = arith.cmpf one, %35, %35 : vector<8x128xf32>
      %37 = arith.addf %22, %33 : vector<8x128xf32>
      %38 = math.absf %35 : vector<8x128xf32>
      %cst_23 = arith.constant 0.000000e+00 : f32
      %39 = vector.broadcast %cst_23 : f32 to vector<8x128xf32>
      %40 = arith.subf %39, %38 : vector<8x128xf32>
      %41 = math.exp %40 : vector<8x128xf32>
      %42 = math.log1p %41 : vector<8x128xf32>
      %43 = arith.addf %34, %42 : vector<8x128xf32>
      %44 = arith.select %36, %37, %43 : vector<8x128xi1>, vector<8x128xf32>
      %45 = arith.addf %32, %17 : vector<8x128xf32>
      %c2_i32 = arith.constant 2 : i32
      %46 = vector.broadcast %c2_i32 : i32 to vector<8x128xi32>
      %47 = arith.cmpi slt, %0, %46 : vector<8x128xi32>
      %c2_i32_24 = arith.constant 2 : i32
      %48 = tpu.dynamic_rotate %44 by %c2_i32_24 dim 1 : vector<8x128xf32>, i32 -> vector<8x128xf32>
      %cst_25 = arith.constant -1.000000e+30 : f32
      %49 = vector.broadcast %cst_25 : f32 to vector<8x128xf32>
      %50 = arith.select %47, %49, %48 : vector<8x128xi1>, vector<8x128xf32>
      %c2_i32_26 = arith.constant 2 : i32
      %51 = vector.broadcast %c2_i32_26 : i32 to vector<8x128xi32>
      %52 = arith.cmpi slt, %0, %51 : vector<8x128xi32>
      %c2_i32_27 = arith.constant 2 : i32
      %53 = tpu.dynamic_rotate %45 by %c2_i32_27 dim 1 : vector<8x128xf32>, i32 -> vector<8x128xf32>
      %cst_28 = arith.constant 0.000000e+00 : f32
      %54 = vector.broadcast %cst_28 : f32 to vector<8x128xf32>
      %55 = arith.select %52, %54, %53 : vector<8x128xi1>, vector<8x128xf32>
      %56 = arith.addf %50, %45 : vector<8x128xf32>
      %57 = arith.maximumf %44, %56 : vector<8x128xf32>
      %58 = arith.subf %44, %56 : vector<8x128xf32>
      %59 = arith.cmpf one, %58, %58 : vector<8x128xf32>
      %60 = arith.addf %44, %56 : vector<8x128xf32>
      %61 = math.absf %58 : vector<8x128xf32>
      %cst_29 = arith.constant 0.000000e+00 : f32
      %62 = vector.broadcast %cst_29 : f32 to vector<8x128xf32>
      %63 = arith.subf %62, %61 : vector<8x128xf32>
      %64 = math.exp %63 : vector<8x128xf32>
      %65 = math.log1p %64 : vector<8x128xf32>
      %66 = arith.addf %57, %65 : vector<8x128xf32>
      %67 = arith.select %59, %60, %66 : vector<8x128xi1>, vector<8x128xf32>
      %68 = arith.addf %55, %45 : vector<8x128xf32>
      %c4_i32 = arith.constant 4 : i32
      %69 = vector.broadcast %c4_i32 : i32 to vector<8x128xi32>
      %70 = arith.cmpi slt, %0, %69 : vector<8x128xi32>
      %c4_i32_30 = arith.constant 4 : i32
      %71 = tpu.dynamic_rotate %67 by %c4_i32_30 dim 1 : vector<8x128xf32>, i32 -> vector<8x128xf32>
      %cst_31 = arith.constant -1.000000e+30 : f32
      %72 = vector.broadcast %cst_31 : f32 to vector<8x128xf32>
      %73 = arith.select %70, %72, %71 : vector<8x128xi1>, vector<8x128xf32>
      %74 = arith.addf %73, %68 : vector<8x128xf32>
      %75 = arith.maximumf %67, %74 : vector<8x128xf32>
      %76 = arith.subf %67, %74 : vector<8x128xf32>
      %77 = arith.cmpf one, %76, %76 : vector<8x128xf32>
      %78 = arith.addf %67, %74 : vector<8x128xf32>
      %79 = math.absf %76 : vector<8x128xf32>
      %cst_32 = arith.constant 0.000000e+00 : f32
      %80 = vector.broadcast %cst_32 : f32 to vector<8x128xf32>
      %81 = arith.subf %80, %79 : vector<8x128xf32>
      %82 = math.exp %81 : vector<8x128xf32>
      %83 = math.log1p %82 : vector<8x128xf32>
      %84 = arith.addf %75, %83 : vector<8x128xf32>
      %85 = arith.select %77, %78, %84 : vector<8x128xi1>, vector<8x128xf32>
      %c0_33 = arith.constant 0 : index
      %c0_34 = arith.constant 0 : index
      %86 = vector.load %arg7[%c0_33, %c0_34] : memref<8x128xf32, #tpu.memory_space<vmem>>, vector<8x128xf32>
      tpu.vector_store %arg7[%c0_33, %c0_34], %85 {strides = array<i32>} : memref<8x128xf32, #tpu.memory_space<vmem>>, vector<8x128xf32>,
      %c0_35 = arith.constant 0 : index
      %c0_36 = arith.constant 0 : index
      %87 = vector.load %arg6[%c0_35, %c0_36] : memref<8x128xf32, #tpu.memory_space<vmem>>, vector<8x128xf32>
      %88 = vector.broadcast %14 : i32 to vector<8x1xi32>
      %89 = arith.cmpi eq, %4, %88 : vector<8x1xi32>
      %90 = arith.mulf %85, %5 : vector<8x128xf32>
      %cst_37 = arith.constant 0.000000e+00 : f32
      %91 = vector.shape_cast %89 : vector<8x1xi1> to vector<8x1xi1>
      %92 = vector.broadcast %91 : vector<8x1xi1> to vector<8x128xi1>
      %93 = vector.broadcast %cst_37 : f32 to vector<8x128xf32>
      %94 = arith.select %92, %90, %93 : vector<8x128xi1>, vector<8x128xf32>
      %95 = arith.addf %87, %94 : vector<8x128xf32>
      %c0_38 = arith.constant 0 : index
      %c0_39 = arith.constant 0 : index
      %96 = vector.load %arg6[%c0_38, %c0_39] : memref<8x128xf32, #tpu.memory_space<vmem>>, vector<8x128xf32>
      tpu.vector_store %arg6[%c0_38, %c0_39], %95 {strides = array<i32>} : memref<8x128xf32, #tpu.memory_space<vmem>>, vector<8x128xf32>,
    }
    %c9_i32_5 = arith.constant 9 : i32
    %c5_i32 = arith.constant 5 : i32
    %7 = vector.broadcast %c5_i32 : i32 to vector<8x128xi32>
    %8 = arith.cmpi slt, %0, %7 : vector<8x128xi32>
    %c0_6 = arith.constant 0 : index
    %c0_7 = arith.constant 0 : index
    %9 = vector.load %arg7[%c0_6, %c0_7] : memref<8x128xf32, #tpu.memory_space<vmem>>, vector<8x128xf32>
    %cst = arith.constant -1.000000e+30 : f32
    %10 = vector.broadcast %cst : f32 to vector<8x128xf32>
    %11 = arith.select %8, %9, %10 : vector<8x128xi1>, vector<8x128xf32>
    %c0_8 = arith.constant 0 : index
    %c0_9 = arith.constant 0 : index
    %12 = vector.load %arg7[%c0_8, %c0_9] : memref<8x128xf32, #tpu.memory_space<vmem>>, vector<8x128xf32>
    tpu.vector_store %arg7[%c0_8, %c0_9], %11 {strides = array<i32>} : memref<8x128xf32, #tpu.memory_space<vmem>>, vector<8x128xf32>,
    return
  }
  func.func @transform_0(%arg0: i32, %arg1: i32) -> (i32, i32, i32) {
    %c0_i32 = arith.constant 0 : i32
    %c0_i32_0 = arith.constant 0 : i32
    return %arg1, %arg0, %c0_i32 : i32, i32, i32
  }
  func.func @transform_1(%arg0: i32, %arg1: i32) -> (i32, i32, i32) {
    %c0_i32 = arith.constant 0 : i32
    %c0_i32_0 = arith.constant 0 : i32
    return %arg1, %arg0, %c0_i32 : i32, i32, i32
  }
  func.func @transform_2(%arg0: i32, %arg1: i32) -> (i32, i32) {
    %c0_i32 = arith.constant 0 : i32
    %c0_i32_0 = arith.constant 0 : i32
    return %arg0, %c0_i32 : i32, i32
  }
  func.func @transform_3(%arg0: i32, %arg1: i32) -> (i32, i32) {
    %c0_i32 = arith.constant 0 : i32
    %c0_i32_0 = arith.constant 0 : i32
    return %arg0, %c0_i32 : i32, i32
  }
  func.func @transform_4(%arg0: i32, %arg1: i32) -> (i32, i32) {
    %c0_i32 = arith.constant 0 : i32
    %c0_i32_0 = arith.constant 0 : i32
    return %arg0, %c0_i32 : i32, i32
  }
}

</mosaic_0001>

<llo_original>
// kernel: transducer_forward.24
$region0: #{transducer_forward.24}
  #allocation0 [shape = 'u32[]', space=smem, size = 0x4, offset = 0x4, fixed_abs, tag = 'smem constant byte address 0x4 - core index']
  #allocation1 [shape = 'u32[144,128]{1,0:T(1,128)}', space=vmem, size = 0x12000, scoped, tag = 'internal scratch']
  %s0 = inlined_call_operand.vmem [shape: bf16[16,32], index: 0, kind: input, shape index: {}]
  %s1 = inlined_call_operand.vmem [shape: bf16[32,128], index: 1, kind: input, shape index: {}]
  %s2 = inlined_call_operand.vmem [shape: f32[1,128], index: 2, kind: input, shape index: {}]
  %s3 = inlined_call_operand.vmem [shape: f32[16,128], index: 3, kind: output, shape index: {}]
  %s4 = sld [smem:[#allocation0]]
  $region22: #{transducer_forward.24} parent=0
    _
  %s6 = ssub.s32 1, %s4
  %s7 = scalar_select 0, %s6, %s4
  // Predicated region
  $region2: #{transducer_forward.24} parent=0 // pred_check
    _
  $region3: #{transducer_forward.24} parent=0 // pred_check_branch
    %9 = sbr.rel (0) target = $region5
  $region4: #{transducer_forward.24} parent=0 // pred_region
    _
  $region5: #{transducer_forward.24} parent=0 // pred_fallthru
    _
  // Predicated region
  $region6: #{transducer_forward.24} parent=0 // pred_check
    _
  $region7: #{transducer_forward.24} parent=0 // pred_check_branch
    %11 = sbr.rel (0) target = $region9
  $region8: #{transducer_forward.24} parent=0 // pred_region
    _
  $region9: #{transducer_forward.24} parent=0 // pred_fallthru
    _
  // Predicated region
  $region10: #{transducer_forward.24} parent=0 // pred_check
    _
  $region11: #{transducer_forward.24} parent=0 // pred_check_branch
    %13 = sbr.rel (0) target = $region13
  $region12: #{transducer_forward.24} parent=0 // pred_region
    _
  $region13: #{transducer_forward.24} parent=0 // pred_fallthru
    _
  %v15 = vld [vmem:[%s0] sm:$0xf]
  %v16 = vld [vmem:[%s0 + $0x4] sm:$0xf]
  %v17 = vld [vmem:[%s1] sm:$0xf]
  %v18 = vld [vmem:[%s1 + $0x4] sm:$0xf]
  %v19 = vld [vmem:[%s1 + $0x8] sm:$0xf]
  %v20 = vld [vmem:[%s1 + $0xc] sm:$0xf]
  %v21 = vld [vmem:[%s2] sm:$0x1]
  %v23 = vlaneseq
  %v24 = vshrl.u32 %v23, 7
  %v25 = vsub.s32 0, %v24
  %v26 = vrot.slane %v21, %v25
  %v30 = vunpack.c.l.b16 %v15
  %v31 = vunpack.c.l.b16 %v16
  %v32 = vpack.c.b16 %v31, %v30
  %v37 = vunpack.c.l.b16 %v17
  %v38 = vunpack.c.l.b16 %v18
  %v39 = vunpack.c.l.b16 %v19
  %v40 = vunpack.c.l.b16 %v20
  %v41 = vpack.c.b16 %v38, %v37
  %v42 = vpack.c.b16 %v40, %v39
  %vm45 = vcmask 261120
  %v47 = vsel %vm45, %v32, 0
  %49 = vmatprep.subr.bf16.mxu0 0
  %50 = vmatpush1.bf16.msra.mxu0 0
  %51 = vmatprep.subr.bf16.mxu0 0
  %52 = vmatpush1.bf16.msra.mxu0 0
  %53 = vmatprep.subr.bf16.mxu0 0
  %54 = vmatpush1.bf16.msra.mxu0 0
  %55 = vmatprep.subr.bf16.mxu0 0
  %56 = vmatpush1.bf16.msra.mxu0 0
  %57 = vmatprep.subr.bf16.mxu0 0
  %58 = vmatpush1.bf16.msra.mxu0 0
  %59 = vmatprep.subr.bf16.mxu0 0
  %60 = vmatpush1.bf16.msra.mxu0 0
  %61 = vmatprep.subr.bf16.mxu0 0
  %62 = vmatpush1.bf16.msra.mxu0 %v42
  %63 = vmatprep.subr.bf16.mxu0 0
  %64 = vmatpush1.bf16.msra.mxu0 %v41
  %65 = vmatprep.subr.bf16.mxu0 0
  %66 = vmatpush2.bf16.msra.mxu0 0
  %67 = vmatprep.subr.bf16.mxu0 0
  %68 = vmatpush2.bf16.msra.mxu0 0
  %69 = vmatprep.subr.bf16.mxu0 0
  %70 = vmatpush2.bf16.msra.mxu0 0
  %71 = vmatprep.subr.bf16.mxu0 0
  %72 = vmatpush2.bf16.msra.mxu0 0
  %73 = vmatprep.subr.bf16.mxu0 0
  %74 = vmatpush2.bf16.msra.mxu0 0
  %75 = vmatprep.subr.bf16.mxu0 0
  %76 = vmatpush2.bf16.msra.mxu0 0
  %77 = vmatprep.subr.bf16.mxu0 0
  %78 = vmatpush2.bf16.msra.mxu0 0
  %79 = vmatprep.subr.bf16.mxu0 0
  %80 = vmatpush2.bf16.msra.mxu0 0
  %81 = vmatprep.mubr.bf16.mxu0 0
  %82 = vmatmul.mubr.bf16.gmra.mxu0 %v47
  %v83 = vpop.f32.mrf.mxu0
  %v84 = vadd.f32 %v26, %v83
  %v85 = vpop.f32.mrf.mxu0
  %v86 = vpop.f32.mrf.mxu0
  %v87 = vadd.f32 %v26, %v86
  %v88 = vpop.f32.mrf.mxu0
  %89 = vdwg.mxu0
  %90 = vst [vmem:[%s3] sm:$0xff] %v84
  %91 = vst [vmem:[%s3 + $0x8] sm:$0xff] %v87
  // Predicated region
  $region14: #{transducer_forward.24} parent=0 // pred_check
    _
  $region15: #{transducer_forward.24} parent=0 // pred_check_branch
    %93 = sbr.rel (0) target = $region17
  $region16: #{transducer_forward.24} parent=0 // pred_region
    _
  $region17: #{transducer_forward.24} parent=0 // pred_fallthru
    _
  // Predicated region
  $region18: #{transducer_forward.24} parent=0 // pred_check
    _
  $region19: #{transducer_forward.24} parent=0 // pred_check_branch
    %95 = sbr.rel (0) target = $region21
  $region20: #{transducer_forward.24} parent=0 // pred_region
    _
  $region21: #{transducer_forward.24} parent=0 // pred_fallthru
    _

// kernel: transducer_forward.15
$region0: #{transducer_forward.15}
  #allocation0 [shape = 'u32[]', space=smem, size = 0x4, offset = 0x4, fixed_abs, tag = 'smem constant byte address 0x4 - core index']
  #allocation1 [shape = 'u32[144,128]{1,0:T(1,128)}', space=vmem, size = 0x12000, scoped, tag = 'internal scratch']
  %s0 = inlined_call_operand.vmem [shape: f32[16,16], index: 0, kind: input, shape index: {}]
  %s1 = inlined_call_operand.vmem [shape: bf16[16,128], index: 1, kind: input, shape index: {}]
  %s2 = inlined_call_operand.vmem [shape: f32[1,128], index: 2, kind: input, shape index: {}]
  %s3 = inlined_call_operand.vmem [shape: bf16[16,128], index: 3, kind: output, shape index: {}]
  %s4 = sld [smem:[#allocation0]]
  $region22: #{transducer_forward.15} parent=0
    _
  %s6 = ssub.s32 1, %s4
  %s7 = scalar_select 0, %s6, %s4
  // Predicated region
  $region2: #{transducer_forward.15} parent=0 // pred_check
    _
  $region3: #{transducer_forward.15} parent=0 // pred_check_branch
    %9 = sbr.rel (0) target = $region5
  $region4: #{transducer_forward.15} parent=0 // pred_region
    _
  $region5: #{transducer_forward.15} parent=0 // pred_fallthru
    _
  // Predicated region
  $region6: #{transducer_forward.15} parent=0 // pred_check
    _
  $region7: #{transducer_forward.15} parent=0 // pred_check_branch
    %11 = sbr.rel (0) target = $region9
  $region8: #{transducer_forward.15} parent=0 // pred_region
    _
  $region9: #{transducer_forward.15} parent=0 // pred_fallthru
    _
  // Predicated region
  $region10: #{transducer_forward.15} parent=0 // pred_check
    _
  $region11: #{transducer_forward.15} parent=0 // pred_check_branch
    %13 = sbr.rel (0) target = $region13
  $region12: #{transducer_forward.15} parent=0 // pred_region
    _
  $region13: #{transducer_forward.15} parent=0 // pred_fallthru
    _
  %v15 = vld [vmem:[%s0] sm:$0xff]
  %v16 = vld [vmem:[%s0 + $0x8] sm:$0xff]
  %v17 = vpack.c.bf16 %v16, %v15
  %v18 = vld [vmem:[%s1] sm:$0xf]
  %v19 = vld [vmem:[%s1 + $0x4] sm:$0xf]
  %v20 = vld [vmem:[%s2] sm:$0x1]
  %v22 = vlaneseq
  %v23 = vshrl.u32 %v22, 7
  %v24 = vsub.s32 0, %v23
  %v25 = vrot.slane %v20, %v24
  %v29 = vunpack.c.l.b16 %v18
  %v30 = vunpack.c.l.b16 %v19
  %v31 = vpack.c.b16 %v30, %v29
  %vm33 = vcmask 130048
  %v35 = vsel %vm33, %v17, 0
  %37 = vmatprep.subr.bf16.mxu0 0
  %38 = vmatpush1.bf16.msra.mxu0 0
  %39 = vmatprep.subr.bf16.mxu0 0
  %40 = vmatpush1.bf16.msra.mxu0 0
  %41 = vmatprep.subr.bf16.mxu0 0
  %42 = vmatpush1.bf16.msra.mxu0 0
  %43 = vmatprep.subr.bf16.mxu0 0
  %44 = vmatpush1.bf16.msra.mxu0 0
  %45 = vmatprep.subr.bf16.mxu0 0
  %46 = vmatpush1.bf16.msra.mxu0 0
  %47 = vmatprep.subr.bf16.mxu0 0
  %48 = vmatpush1.bf16.msra.mxu0 0
  %49 = vmatprep.subr.bf16.mxu0 0
  %50 = vmatpush1.bf16.msra.mxu0 0
  %51 = vmatprep.subr.bf16.mxu0 0
  %52 = vmatpush1.bf16.msra.mxu0 %v31
  %53 = vmatprep.subr.bf16.mxu0 0
  %54 = vmatpush2.bf16.msra.mxu0 0
  %55 = vmatprep.subr.bf16.mxu0 0
  %56 = vmatpush2.bf16.msra.mxu0 0
  %57 = vmatprep.subr.bf16.mxu0 0
  %58 = vmatpush2.bf16.msra.mxu0 0
  %59 = vmatprep.subr.bf16.mxu0 0
  %60 = vmatpush2.bf16.msra.mxu0 0
  %61 = vmatprep.subr.bf16.mxu0 0
  %62 = vmatpush2.bf16.msra.mxu0 0
  %63 = vmatprep.subr.bf16.mxu0 0
  %64 = vmatpush2.bf16.msra.mxu0 0
  %65 = vmatprep.subr.bf16.mxu0 0
  %66 = vmatpush2.bf16.msra.mxu0 0
  %67 = vmatprep.subr.bf16.mxu0 0
  %68 = vmatpush2.bf16.msra.mxu0 0
  %69 = vmatprep.mubr.bf16.mxu0 0
  %70 = vmatmul.mubr.bf16.gmra.mxu0 %v35
  %v71 = vpop.f32.mrf.mxu0
  %v72 = vadd.f32 %v25, %v71
  %v73 = vpop.f32.mrf.mxu0
  %v74 = vpop.f32.mrf.mxu0
  %v75 = vadd.f32 %v25, %v74
  %v76 = vpop.f32.mrf.mxu0
  %77 = vdwg.mxu0
  %v78 = vtanh.pop %v72
  %v79 = vtanh.pop %v75
  %v80 = vpack.c.bf16 %v79, %v78
  %v82 = vunpack.c.l.b16 %v80
  %v83 = vunpack.c.h.b16 %v80
  %v84 = vpack.c.b16 %v82, %v82
  %v85 = vpack.c.b16 %v83, %v83
  %88 = vst [vmem:[%s3] sm:$0xf] %v84
  %89 = vst [vmem:[%s3 + $0x4] sm:$0xf] %v85
  // Predicated region
  $region14: #{transducer_forward.15} parent=0 // pred_check
    _
  $region15: #{transducer_forward.15} parent=0 // pred_check_branch
    %91 = sbr.rel (0) target = $region17
  $region16: #{transducer_forward.15} parent=0 // pred_region
    _
  $region17: #{transducer_forward.15} parent=0 // pred_fallthru
    _
  // Predicated region
  $region18: #{transducer_forward.15} parent=0 // pred_check
    _
  $region19: #{transducer_forward.15} parent=0 // pred_check_branch
    %93 = sbr.rel (0) target = $region21
  $region20: #{transducer_forward.15} parent=0 // pred_region
    _
  $region21: #{transducer_forward.15} parent=0 // pred_fallthru
    _

// kernel: transducer_forward.23
$region0: #{transducer_forward.23}
  #allocation0 [shape = 'u32[]', space=smem, size = 0x4, offset = 0x4, fixed_abs, tag = 'smem constant byte address 0x4 - core index']
  #allocation1 [shape = 'u32[144,128]{1,0:T(1,128)}', space=vmem, size = 0x12000, scoped, tag = 'internal scratch']
  %s0 = inlined_call_operand.vmem [shape: f32[16,64], index: 0, kind: input, shape index: {}]
  %s1 = inlined_call_operand.vmem [shape: bf16[64,128], index: 1, kind: input, shape index: {}]
  %s2 = inlined_call_operand.vmem [shape: f32[1,128], index: 2, kind: input, shape index: {}]
  %s3 = inlined_call_operand.vmem [shape: bf16[16,128], index: 3, kind: output, shape index: {}]
  %s4 = sld [smem:[#allocation0]]
  $region22: #{transducer_forward.23} parent=0
    _
  %s6 = ssub.s32 1, %s4
  %s7 = scalar_select 0, %s6, %s4
  // Predicated region
  $region2: #{transducer_forward.23} parent=0 // pred_check
    _
  $region3: #{transducer_forward.23} parent=0 // pred_check_branch
    %9 = sbr.rel (0) target = $region5
  $region4: #{transducer_forward.23} parent=0 // pred_region
    _
  $region5: #{transducer_forward.23} parent=0 // pred_fallthru
    _
  // Predicated region
  $region6: #{transducer_forward.23} parent=0 // pred_check
    _
  $region7: #{transducer_forward.23} parent=0 // pred_check_branch
    %11 = sbr.rel (0) target = $region9
  $region8: #{transducer_forward.23} parent=0 // pred_region
    _
  $region9: #{transducer_forward.23} parent=0 // pred_fallthru
    _
  // Predicated region
  $region10: #{transducer_forward.23} parent=0 // pred_check
    _
  $region11: #{transducer_forward.23} parent=0 // pred_check_branch
    %13 = sbr.rel (0) target = $region13
  $region12: #{transducer_forward.23} parent=0 // pred_region
    _
  $region13: #{transducer_forward.23} parent=0 // pred_fallthru
    _
  %v15 = vld [vmem:[%s0] sm:$0xff]
  %v16 = vld [vmem:[%s0 + $0x8] sm:$0xff]
  %v17 = vpack.c.bf16 %v16, %v15
  %v18 = vld [vmem:[%s1] sm:$0xf]
  %v19 = vld [vmem:[%s1 + $0x4] sm:$0xf]
  %v20 = vld [vmem:[%s1 + $0x8] sm:$0xf]
  %v21 = vld [vmem:[%s1 + $0xc] sm:$0xf]
  %v22 = vld [vmem:[%s1 + $0x10] sm:$0xf]
  %v23 = vld [vmem:[%s1 + $0x14] sm:$0xf]
  %v24 = vld [vmem:[%s1 + $0x18] sm:$0xf]
  %v25 = vld [vmem:[%s1 + $0x1c] sm:$0xf]
  %v26 = vld [vmem:[%s2] sm:$0x1]
  %v28 = vlaneseq
  %v29 = vshrl.u32 %v28, 7
  %v30 = vsub.s32 0, %v29
  %v31 = vrot.slane %v26, %v30
  %v41 = vunpack.c.l.b16 %v18
  %v42 = vunpack.c.l.b16 %v19
  %v43 = vunpack.c.l.b16 %v20
  %v44 = vunpack.c.l.b16 %v21
  %v45 = vunpack.c.l.b16 %v22
  %v46 = vunpack.c.l.b16 %v23
  %v47 = vunpack.c.l.b16 %v24
  %v48 = vunpack.c.l.b16 %v25
  %v49 = vpack.c.b16 %v42, %v41
  %v50 = vpack.c.b16 %v44, %v43
  %v51 = vpack.c.b16 %v46, %v45
  %v52 = vpack.c.b16 %v48, %v47
  %vm57 = vcmask 523264
  %v59 = vsel %vm57, %v17, 0
  %61 = vmatprep.subr.bf16.mxu0 0
  %62 = vmatpush1.bf16.msra.mxu0 0
  %63 = vmatprep.subr.bf16.mxu0 0
  %64 = vmatpush1.bf16.msra.mxu0 0
  %65 = vmatprep.subr.bf16.mxu0 0
  %66 = vmatpush1.bf16.msra.mxu0 0
  %67 = vmatprep.subr.bf16.mxu0 0
  %68 = vmatpush1.bf16.msra.mxu0 0
  %69 = vmatprep.subr.bf16.mxu0 0
  %70 = vmatpush1.bf16.msra.mxu0 %v52
  %71 = vmatprep.subr.bf16.mxu0 0
  %72 = vmatpush1.bf16.msra.mxu0 %v51
  %73 = vmatprep.subr.bf16.mxu0 0
  %74 = vmatpush1.bf16.msra.mxu0 %v50
  %75 = vmatprep.subr.bf16.mxu0 0
  %76 = vmatpush1.bf16.msra.mxu0 %v49
  %77 = vmatprep.subr.bf16.mxu0 0
  %78 = vmatpush2.bf16.msra.mxu0 0
  %79 = vmatprep.subr.bf16.mxu0 0
  %80 = vmatpush2.bf16.msra.mxu0 0
  %81 = vmatprep.subr.bf16.mxu0 0
  %82 = vmatpush2.bf16.msra.mxu0 0
  %83 = vmatprep.subr.bf16.mxu0 0
  %84 = vmatpush2.bf16.msra.mxu0 0
  %85 = vmatprep.subr.bf16.mxu0 0
  %86 = vmatpush2.bf16.msra.mxu0 0
  %87 = vmatprep.subr.bf16.mxu0 0
  %88 = vmatpush2.bf16.msra.mxu0 0
  %89 = vmatprep.subr.bf16.mxu0 0
  %90 = vmatpush2.bf16.msra.mxu0 0
  %91 = vmatprep.subr.bf16.mxu0 0
  %92 = vmatpush2.bf16.msra.mxu0 0
  %93 = vmatprep.mubr.bf16.mxu0 0
  %94 = vmatmul.mubr.bf16.gmra.mxu0 %v59
  %v95 = vpop.f32.mrf.mxu0
  %v96 = vadd.f32 %v31, %v95
  %v97 = vpop.f32.mrf.mxu0
  %v98 = vpop.f32.mrf.mxu0
  %v99 = vadd.f32 %v31, %v98
  %v100 = vpop.f32.mrf.mxu0
  %101 = vdwg.mxu0
  %v102 = vmax.f32 %v96, 0.0
  %v103 = vmax.f32 %v99, 0.0
  %v104 = vpack.c.bf16 %v103, %v102
  %v106 = vunpack.c.l.b16 %v104
  %v107 = vunpack.c.h.b16 %v104
  %v108 = vpack.c.b16 %v106, %v106
  %v109 = vpack.c.b16 %v107, %v107
  %112 = vst [vmem:[%s3] sm:$0xf] %v108
  %113 = vst [vmem:[%s3 + $0x4] sm:$0xf] %v109
  // Predicated region
  $region14: #{transducer_forward.23} parent=0 // pred_check
    _
  $region15: #{transducer_forward.23} parent=0 // pred_check_branch
    %115 = sbr.rel (0) target = $region17
  $region16: #{transducer_forward.23} parent=0 // pred_region
    _
  $region17: #{transducer_forward.23} parent=0 // pred_fallthru
    _
  // Predicated region
  $region18: #{transducer_forward.23} parent=0 // pred_check
    _
  $region19: #{transducer_forward.23} parent=0 // pred_check_branch
    %117 = sbr.rel (0) target = $region21
  $region20: #{transducer_forward.23} parent=0 // pred_region
    _
  $region21: #{transducer_forward.23} parent=0 // pred_fallthru
    _

// kernel: transducer_forward.26
$region0: #{transducer_forward.26}
  #allocation0 [shape = 'u32[]', space=smem, size = 0x4, offset = 0x4, fixed_abs, tag = 'smem constant byte address 0x4 - core index']
  #allocation1 [shape = 'u32[144,128]{1,0:T(1,128)}', space=vmem, size = 0x12000, scoped, tag = 'internal scratch']
  %s0 = inlined_call_operand.vmem [shape: f32[2,8,16], index: 0, kind: input, shape index: {}]
  %s1 = inlined_call_operand.vmem [shape: f32[2,16,128], index: 1, kind: input, shape index: {}]
  %s2 = inlined_call_operand.vmem [shape: f32[2,8,128], index: 2, kind: output, shape index: {}]
  %s3 = sld [smem:[#allocation0]]
  $region41: #{transducer_forward.26} parent=0
    _
  %s5 = ssub.s32 1, %s3
  %s6 = scalar_select 0, %s5, %s3
  loop: start=0, step=1, limit=4
  $region2: #{transducer_forward.26} parent=0 // loop_pre_header
    _
  $region3: #{transducer_forward.26} parent=0 // loop_header
    %s8 = sphi 0, %s12
    %p9 = scmp.ge.s32.totalorder %s8, 4
    %s15 = sphi 0, %s27
    %s16 = sphi 0, %s23
    %s17 = sphi 0, %s15
    %s18 = sphi 0, %s16
    %s19 = sphi 0, %s17
    %s20 = sphi 0, %s18
    %s32 = sphi 0, %s34
    %s35 = sphi 0, %s32
    %s36 = sphi 0, %s35
    %s52 = sphi 0, %s36
    %s58 = sphi 0, %s60
    %s61 = sphi 0, %s58
    %s62 = sphi 0, %s61
    %s78 = sphi 0, %s62
    %s86 = sphi 0, %s88
    %s89 = sphi 0, %s86
    %s90 = sphi 0, %s89
    %s106 = sphi 0, %s90
  $region4: #{transducer_forward.26} parent=0 // loop_header_branch
    %11 = sbr.rel (%p9) target = $region8
  $region5: #{transducer_forward.26} parent=0 // loop_body
    %s13 = ssub.s32 %s8, 1
    %s14 = ssub.s32 %s8, 2
    %s21 = sadd.s32 1, %s16
    %p22 = scmp.ge.s32.totalorder %s21, 1
    %s23 = scalar_select %p22, 0, %s21
    %s24 = sadd.s32 1, %s15
    %s25 = scalar_select %p22, %s24, %s15
    %p26 = scmp.ge.s32.totalorder %s25, 2
    %s27 = scalar_select %p26, 0, %s25
    %s28 = ssub.s32 %s15, %s27
    %s29 = ssub.s32 %s16, %s23
    %s30 = sor.u32 %s28, %s29
    %p31 = scmp.eq.s32.totalorder %s30, 0
    %s33 = sadd.s32 %s32, 1
    %s34 = scalar_select %p31, %s32, %s33
    %p37 = pneg %p31
    %p38 = scmp.eq.s32.totalorder %s8, 1
    %p39 = por %p37, %p38
    %p40 = scmp.ne.s32.totalorder %s32, %s35
    %p41 = scmp.eq.s32.totalorder %s8, 0
    %p42 = por %p40, %p41
    %p43 = scmp.ne.s32.totalorder %s32, %s35
    %p44 = scmp.eq.s32.totalorder %s13, 1
    %p45 = por %p43, %p44
    %p46 = scmp.ne.s32.totalorder %s35, %s36
    %p47 = scmp.eq.s32.totalorder %s13, 0
    %p48 = por %p46, %p47
    %p49 = scmp.ne.s32.totalorder %s35, %s36
    %p50 = scmp.eq.s32.totalorder %s14, 1
    %p51 = por %p49, %p50
    %p53 = scmp.ne.s32.totalorder %s36, %s52
    %p54 = scmp.eq.s32.totalorder %s14, 0
    %p55 = por %p53, %p54
    %s56 = ssub.s32 %s15, %s27
    %p57 = scmp.eq.s32.totalorder %s56, 0
    %s59 = sadd.s32 %s58, 1
    %s60 = scalar_select %p57, %s58, %s59
    %p63 = pneg %p57
    %p64 = scmp.eq.s32.totalorder %s8, 1
    %p65 = por %p63, %p64
    %p66 = scmp.ne.s32.totalorder %s58, %s61
    %p67 = scmp.eq.s32.totalorder %s8, 0
    %p68 = por %p66, %p67
    %p69 = scmp.ne.s32.totalorder %s58, %s61
    %p70 = scmp.eq.s32.totalorder %s13, 1
    %p71 = por %p69, %p70
    %p72 = scmp.ne.s32.totalorder %s61, %s62
    %p73 = scmp.eq.s32.totalorder %s13, 0
    %p74 = por %p72, %p73
    %p75 = scmp.ne.s32.totalorder %s61, %s62
    %p76 = scmp.eq.s32.totalorder %s14, 1
    %p77 = por %p75, %p76
    %p79 = scmp.ne.s32.totalorder %s62, %s78
    %p80 = scmp.eq.s32.totalorder %s14, 0
    %p81 = por %p79, %p80
    %s82 = ssub.s32 %s15, %s27
    %s83 = ssub.s32 %s16, %s23
    %s84 = sor.u32 %s82, %s83
    %p85 = scmp.eq.s32.totalorder %s84, 0
    %s87 = sadd.s32 %s86, 1
    %s88 = scalar_select %p85, %s86, %s87
    %p91 = pneg %p85
    %p92 = scmp.eq.s32.totalorder %s8, 1
    %p93 = por %p91, %p92
    %p94 = scmp.ne.s32.totalorder %s86, %s89
    %p95 = scmp.eq.s32.totalorder %s8, 0
    %p96 = por %p94, %p95
    %p97 = scmp.ne.s32.totalorder %s86, %s89
    %p98 = scmp.eq.s32.totalorder %s13, 1
    %p99 = por %p97, %p98
    %p100 = scmp.ne.s32.totalorder %s89, %s90
    %p101 = scmp.eq.s32.totalorder %s13, 0
    %p102 = por %p100, %p101
    %p103 = scmp.ne.s32.totalorder %s89, %s90
    %p104 = scmp.eq.s32.totalorder %s14, 1
    %p105 = por %p103, %p104
    %p107 = scmp.ne.s32.totalorder %s90, %s106
    %p108 = scmp.eq.s32.totalorder %s14, 0
    %p109 = por %p107, %p108
    %p110 = scmp.le.s32.totalorder 1, %s8
    %p111 = scmp.lt.s32.totalorder %s8, 3
    %p112 = pnand %p110, %p111
    %p113 = pneg %p112
    // Predicated region
    $region9: #{transducer_forward.26} parent=5 // pred_check
      _
    $region10: #{transducer_forward.26} parent=5 // pred_check_branch
      %115 = sbr.rel (%p112) target = $region12
    $region11: #{transducer_forward.26} parent=5 // pred_region
      %s116 = ssub.s32 %s8, 1
    $region12: #{transducer_forward.26} parent=5 // pred_fallthru
      _
    %p117 = scmp.lt.s32.totalorder %s8, 2
    // Predicated region
    $region13: #{transducer_forward.26} parent=5 // pred_check
      %p118 = pneg %p117
    $region14: #{transducer_forward.26} parent=5 // pred_check_branch
      %120 = sbr.rel (%p118) target = $region16
    $region15: #{transducer_forward.26} parent=5 // pred_region
      // Predicated region
      $region17: #{transducer_forward.26} parent=15 // pred_check
        %p121 = pneg %p42
      $region18: #{transducer_forward.26} parent=15 // pred_check_branch
        %123 = sbr.rel (%p121) target = $region20
      $region19: #{transducer_forward.26} parent=15 // pred_region
        %p124 = scmp.lt.s32.totalorder %s15, 1
        %s125 = scalar_select %p124, %s15, 1
        %p126 = scmp.lt.s32.totalorder %s16, 0
        %s127 = scalar_select %p126, %s16, 0
        %s128 = sadd.s32 %s127, %s125
        %s129 = smul.addr %s128, 8
        %s130 = scalar_lea.vmem %s0, %s129
      $region20: #{transducer_forward.26} parent=15 // pred_fallthru
        _
      // Predicated region
      $region21: #{transducer_forward.26} parent=15 // pred_check
        %p131 = pneg %p68
      $region22: #{transducer_forward.26} parent=15 // pred_check_branch
        %133 = sbr.rel (%p131) target = $region24
      $region23: #{transducer_forward.26} parent=15 // pred_region
        %p134 = scmp.lt.s32.totalorder %s15, 1
        %s135 = scalar_select %p134, %s15, 1
        %s136 = smul.addr %s135, 2
        %s137 = smul.addr %s136, 8
        %s138 = scalar_lea.vmem %s1, %s137
      $region24: #{transducer_forward.26} parent=15 // pred_fallthru
        _
    $region16: #{transducer_forward.26} parent=5 // pred_fallthru
      _
    %p139 = scmp.le.s32.totalorder 1, %s8
    %p140 = scmp.lt.s32.totalorder %s8, 3
    %p141 = pnand %p139, %p140
    %p142 = pneg %p141
    // Predicated region
    $region25: #{transducer_forward.26} parent=5 // pred_check
      _
    $region26: #{transducer_forward.26} parent=5 // pred_check_branch
      %144 = sbr.rel (%p141) target = $region28
    $region27: #{transducer_forward.26} parent=5 // pred_region
      %s145 = ssub.s32 %s8, 1
      %p146 = scmp.lt.s32.totalorder %s17, 1
      %s147 = scalar_select %p146, %s17, 1
      %p148 = scmp.lt.s32.totalorder %s18, 0
      %s149 = scalar_select %p148, %s18, 0
      %s150 = sadd.s32 %s149, %s147
      %s151 = smul.addr %s150, 8
      %s152 = scalar_lea.vmem %s0, %s151
      %p153 = pneg %p48
      %p154 = pneg %p45
      %p155 = scmp.lt.s32.totalorder %s17, 1
      %s156 = scalar_select %p155, %s17, 1
      %s157 = smul.addr %s156, 2
      %s158 = smul.addr %s157, 8
      %s159 = scalar_lea.vmem %s1, %s158
      %p160 = pneg %p74
      %p161 = pneg %p71
      %p162 = pneg %p102
      %p163 = pneg %p99
      %p164 = scmp.lt.s32.totalorder %s17, 1
      %s165 = scalar_select %p164, %s17, 1
      %p166 = scmp.lt.s32.totalorder %s18, 0
      %s167 = scalar_select %p166, %s18, 0
      %s168 = sadd.s32 %s167, %s165
      %s169 = smul.addr %s168, 8
      %s170 = scalar_lea.vmem %s2, %s169
      %p171 = scmp.lt.s32.totalorder %s17, 1
      %s172 = scalar_select %p171, %s17, 1
      %p173 = scmp.lt.s32.totalorder %s18, 0
      %s174 = scalar_select %p173, %s18, 0
      %s175 = sadd.s32 %s174, %s172
      %s176 = smul.addr %s175, 8
      %s177 = scalar_lea.vmem %s0, %s176
      %p178 = scmp.lt.s32.totalorder %s17, 1
      %s179 = scalar_select %p178, %s17, 1
      %s180 = smul.addr %s179, 2
      %s181 = smul.addr %s180, 8
      %s182 = scalar_lea.vmem %s1, %s181
      %p183 = scmp.lt.s32.totalorder %s17, 1
      %s184 = scalar_select %p183, %s17, 1
      %p185 = scmp.lt.s32.totalorder %s18, 0
      %s186 = scalar_select %p185, %s18, 0
      %s187 = sadd.s32 %s186, %s184
      %s188 = smul.addr %s187, 8
      %s189 = scalar_lea.vmem %s2, %s188
      %v191 = vld [vmem:[%s177] sm:$0xff]
      %v192 = vld [vmem:[%s182] sm:$0xff]
      %v193 = vld [vmem:[%s182 + $0x8] sm:$0xff]
      %vm194 = vcmask 130048
      %v195 = vsel %vm194, %v191, -inf
      %196 = vmax.xlane.f32.xlu0 %v195
      %v197 = vpop.xlane.xlu0 %196
      %v198 = vmax.f32 %v197, -1e+30
      %v199 = vmax.f32 %v192, %v193
      %v200 = vrot.slane %v199, 4
      %v201 = vmax.f32 %v199, %v200
      %v202 = vrot.slane %v201, 2
      %v203 = vmax.f32 %v201, %v202
      %v204 = vrot.slane %v203, 1
      %v205 = vmax.f32 %v203, %v204
      %v206 = vmax.f32 %v205, -1e+30
      %v207 = vsub.f32 %v191, %v198
      %v208 = vmul.f32 %v207, 1.442695
      %v209 = vpow.pop %v208
      %v210 = vpack.c.bf16 %v209, %v209
      %v211 = vsub.f32 %v192, %v206
      %v212 = vsub.f32 %v193, %v206
      %v213 = vmul.f32 %v211, 1.442695
      %v214 = vpow.pop %v213
      %v215 = vmul.f32 %v212, 1.442695
      %v216 = vpow.pop %v215
      %v217 = vpack.c.bf16 %v216, %v214
      %v219 = vsel %vm194, %v210, 0
      %221 = vmatprep.subr.bf16.mxu0 0
      %222 = vmatpush1.bf16.msra.mxu0 0
      %223 = vmatprep.subr.bf16.mxu0 0
      %224 = vmatpush1.bf16.msra.mxu0 0
      %225 = vmatprep.subr.bf16.mxu0 0
      %226 = vmatpush1.bf16.msra.mxu0 0
      %227 = vmatprep.subr.bf16.mxu0 0
      %228 = vmatpush1.bf16.msra.mxu0 0
      %229 = vmatprep.subr.bf16.mxu0 0
      %230 = vmatpush1.bf16.msra.mxu0 0
      %231 = vmatprep.subr.bf16.mxu0 0
      %232 = vmatpush1.bf16.msra.mxu0 0
      %233 = vmatprep.subr.bf16.mxu0 0
      %234 = vmatpush1.bf16.msra.mxu0 0
      %235 = vmatprep.subr.bf16.mxu0 0
      %236 = vmatpush1.bf16.msra.mxu0 %v217
      %237 = vmatprep.subr.bf16.mxu0 0
      %238 = vmatpush2.bf16.msra.mxu0 0
      %239 = vmatprep.subr.bf16.mxu0 0
      %240 = vmatpush2.bf16.msra.mxu0 0
      %241 = vmatprep.subr.bf16.mxu0 0
      %242 = vmatpush2.bf16.msra.mxu0 0
      %243 = vmatprep.subr.bf16.mxu0 0
      %244 = vmatpush2.bf16.msra.mxu0 0
      %245 = vmatprep.subr.bf16.mxu0 0
      %246 = vmatpush2.bf16.msra.mxu0 0
      %247 = vmatprep.subr.bf16.mxu0 0
      %248 = vmatpush2.bf16.msra.mxu0 0
      %249 = vmatprep.subr.bf16.mxu0 0
      %250 = vmatpush2.bf16.msra.mxu0 0
      %251 = vmatprep.subr.bf16.mxu0 0
      %252 = vmatpush2.bf16.msra.mxu0 0
      %253 = vmatprep.mubr.bf16.mxu0 0
      %254 = vmatmul.mubr.bf16.gmra.mxu0 %v219
      %v255 = vpop.f32.mrf.mxu0
      %v256 = vadd.f32 0.0, %v255
      %v257 = vpop.f32.mrf.mxu0
      %v258 = vpop.f32.mrf.mxu0
      %v259 = vpop.f32.mrf.mxu0
      %260 = vdwg.mxu0
      %v261 = vmax.f32 %v256, 1e-30
      %v262 = vlog2.pop %v261
      %v263 = vmul.f32 %v262, 0.6931472
      %v264 = vadd.f32 %v263, %v198
      %v265 = vadd.f32 %v264, %v206
      %266 = vst [vmem:[%s189] sm:$0xff] %v265
      %p267 = scmp.lt.s32.totalorder %s17, 1
      %s268 = scalar_select %p267, %s17, 1
      %p269 = scmp.lt.s32.totalorder %s18, 0
      %s270 = scalar_select %p269, %s18, 0
      %s271 = sadd.s32 %s270, %s268
      %s272 = smul.addr %s271, 8
      %s273 = scalar_lea.vmem %s2, %s272
      // Predicated region
      $region29: #{transducer_forward.26} parent=27 // pred_check
        %p274 = pneg %p99
      $region30: #{transducer_forward.26} parent=27 // pred_check_branch
        %276 = sbr.rel (%p274) target = $region32
      $region31: #{transducer_forward.26} parent=27 // pred_region
        _
      $region32: #{transducer_forward.26} parent=27 // pred_fallthru
        _
    $region28: #{transducer_forward.26} parent=5 // pred_fallthru
      _
    %p277 = scmp.le.s32.totalorder 2, %s8
    // Predicated region
    $region33: #{transducer_forward.26} parent=5 // pred_check
      %p278 = pneg %p277
    $region34: #{transducer_forward.26} parent=5 // pred_check_branch
      %280 = sbr.rel (%p278) target = $region36
    $region35: #{transducer_forward.26} parent=5 // pred_region
      %s281 = ssub.s32 %s8, 2
      // Predicated region
      $region37: #{transducer_forward.26} parent=35 // pred_check
        %p282 = pneg %p105
      $region38: #{transducer_forward.26} parent=35 // pred_check_branch
        %284 = sbr.rel (%p282) target = $region40
      $region39: #{transducer_forward.26} parent=35 // pred_region
        %p285 = scmp.lt.s32.totalorder %s19, 1
        %s286 = scalar_select %p285, %s19, 1
        %p287 = scmp.lt.s32.totalorder %s20, 0
        %s288 = scalar_select %p287, %s20, 0
        %s289 = sadd.s32 %s288, %s286
        %s290 = smul.addr %s289, 8
        %s291 = scalar_lea.vmem %s2, %s290
      $region40: #{transducer_forward.26} parent=35 // pred_fallthru
        _
    $region36: #{transducer_forward.26} parent=5 // pred_fallthru
      _
  $region6: #{transducer_forward.26} parent=0 // loop_footer
    %s12 = sadd.s32 1, %s8
  $region7: #{transducer_forward.26} parent=0 // loop_footer_branch
    %7 = sbr.rel target = $region3
  $region8: #{transducer_forward.26} parent=0 // loop_exit
    _

// kernel: transducer_forward.28
$region0: #{transducer_forward.28}
  #allocation0 [shape = 'u32[]', space=smem, size = 0x4, offset = 0x4, fixed_abs, tag = 'smem constant byte address 0x4 - core index']
  #allocation1 [shape = 'u32[144,128]{1,0:T(1,128)}', space=vmem, size = 0x12000, scoped, tag = 'internal scratch']
  %s0 = inlined_call_operand.vmem [shape: f32[2,8,32], index: 0, kind: input, shape index: {}]
  %s1 = inlined_call_operand.vmem [shape: bf16[2,3,8,32], index: 1, kind: input, shape index: {}]
  %s2 = inlined_call_operand.vmem [shape: s32[2,8,3], index: 2, kind: input, shape index: {}]
  %s3 = inlined_call_operand.vmem [shape: bf16[32,128], index: 3, kind: input, shape index: {}]
  %s4 = inlined_call_operand.vmem [shape: f32[1,128], index: 4, kind: input, shape index: {}]
  %s5 = inlined_call_operand.vmem [shape: f32[2,8,3], index: 5, kind: output, shape index: {0}]
  %s6 = inlined_call_operand.vmem [shape: f32[2,8,3], index: 6, kind: output, shape index: {1}]
  %7 = xla_tuple %s5, %s6
  %s8 = sld [smem:[#allocation0]]
  $region61: #{transducer_forward.28} parent=0
    _
  %s10 = ssub.s32 1, %s8
  %s11 = scalar_select 0, %s10, %s8
  loop: start=0, step=1, limit=4
  $region2: #{transducer_forward.28} parent=0 // loop_pre_header
    _
  $region3: #{transducer_forward.28} parent=0 // loop_header
    %s13 = sphi 0, %s17
    %p14 = scmp.ge.s32.totalorder %s13, 4
    %s20 = sphi 0, %s32
    %s21 = sphi 0, %s28
    %s22 = sphi 0, %s20
    %s23 = sphi 0, %s21
    %s24 = sphi 0, %s22
    %s25 = sphi 0, %s23
    %s37 = sphi 0, %s39
    %s40 = sphi 0, %s37
    %s41 = sphi 0, %s40
    %s57 = sphi 0, %s41
    %s65 = sphi 0, %s67
    %s68 = sphi 0, %s65
    %s69 = sphi 0, %s68
    %s85 = sphi 0, %s69
    %s93 = sphi 0, %s95
    %s96 = sphi 0, %s93
    %s97 = sphi 0, %s96
    %s113 = sphi 0, %s97
    %s117 = sphi 0, %s117
    %s119 = sphi 0, %s117
    %s120 = sphi 0, %s119
    %s134 = sphi 0, %s120
    %s138 = sphi 0, %s138
    %s140 = sphi 0, %s138
    %s141 = sphi 0, %s140
    %s155 = sphi 0, %s141
    %s163 = sphi 0, %s165
    %s166 = sphi 0, %s163
    %s167 = sphi 0, %s166
    %s183 = sphi 0, %s167
    %s191 = sphi 0, %s193
    %s194 = sphi 0, %s191
    %s195 = sphi 0, %s194
    %s211 = sphi 0, %s195
  $region4: #{transducer_forward.28} parent=0 // loop_header_branch
    %16 = sbr.rel (%p14) target = $region8
  $region5: #{transducer_forward.28} parent=0 // loop_body
    %s18 = ssub.s32 %s13, 1
    %s19 = ssub.s32 %s13, 2
    %s26 = sadd.s32 1, %s21
    %p27 = scmp.ge.s32.totalorder %s26, 1
    %s28 = scalar_select %p27, 0, %s26
    %s29 = sadd.s32 1, %s20
    %s30 = scalar_select %p27, %s29, %s20
    %p31 = scmp.ge.s32.totalorder %s30, 2
    %s32 = scalar_select %p31, 0, %s30
    %s33 = ssub.s32 %s20, %s32
    %s34 = ssub.s32 %s21, %s28
    %s35 = sor.u32 %s33, %s34
    %p36 = scmp.eq.s32.totalorder %s35, 0
    %s38 = sadd.s32 %s37, 1
    %s39 = scalar_select %p36, %s37, %s38
    %p42 = pneg %p36
    %p43 = scmp.eq.s32.totalorder %s13, 1
    %p44 = por %p42, %p43
    %p45 = scmp.ne.s32.totalorder %s37, %s40
    %p46 = scmp.eq.s32.totalorder %s13, 0
    %p47 = por %p45, %p46
    %p48 = scmp.ne.s32.totalorder %s37, %s40
    %p49 = scmp.eq.s32.totalorder %s18, 1
    %p50 = por %p48, %p49
    %p51 = scmp.ne.s32.totalorder %s40, %s41
    %p52 = scmp.eq.s32.totalorder %s18, 0
    %p53 = por %p51, %p52
    %p54 = scmp.ne.s32.totalorder %s40, %s41
    %p55 = scmp.eq.s32.totalorder %s19, 1
    %p56 = por %p54, %p55
    %p58 = scmp.ne.s32.totalorder %s41, %s57
    %p59 = scmp.eq.s32.totalorder %s19, 0
    %p60 = por %p58, %p59
    %s61 = ssub.s32 %s20, %s32
    %s62 = ssub.s32 %s21, %s28
    %s63 = sor.u32 %s61, %s62
    %p64 = scmp.eq.s32.totalorder %s63, 0
    %s66 = sadd.s32 %s65, 1
    %s67 = scalar_select %p64, %s65, %s66
    %p70 = pneg %p64
    %p71 = scmp.eq.s32.totalorder %s13, 1
    %p72 = por %p70, %p71
    %p73 = scmp.ne.s32.totalorder %s65, %s68
    %p74 = scmp.eq.s32.totalorder %s13, 0
    %p75 = por %p73, %p74
    %p76 = scmp.ne.s32.totalorder %s65, %s68
    %p77 = scmp.eq.s32.totalorder %s18, 1
    %p78 = por %p76, %p77
    %p79 = scmp.ne.s32.totalorder %s68, %s69
    %p80 = scmp.eq.s32.totalorder %s18, 0
    %p81 = por %p79, %p80
    %p82 = scmp.ne.s32.totalorder %s68, %s69
    %p83 = scmp.eq.s32.totalorder %s19, 1
    %p84 = por %p82, %p83
    %p86 = scmp.ne.s32.totalorder %s69, %s85
    %p87 = scmp.eq.s32.totalorder %s19, 0
    %p88 = por %p86, %p87
    %s89 = ssub.s32 %s20, %s32
    %s90 = ssub.s32 %s21, %s28
    %s91 = sor.u32 %s89, %s90
    %p92 = scmp.eq.s32.totalorder %s91, 0
    %s94 = sadd.s32 %s93, 1
    %s95 = scalar_select %p92, %s93, %s94
    %p98 = pneg %p92
    %p99 = scmp.eq.s32.totalorder %s13, 1
    %p100 = por %p98, %p99
    %p101 = scmp.ne.s32.totalorder %s93, %s96
    %p102 = scmp.eq.s32.totalorder %s13, 0
    %p103 = por %p101, %p102
    %p104 = scmp.ne.s32.totalorder %s93, %s96
    %p105 = scmp.eq.s32.totalorder %s18, 1
    %p106 = por %p104, %p105
    %p107 = scmp.ne.s32.totalorder %s96, %s97
    %p108 = scmp.eq.s32.totalorder %s18, 0
    %p109 = por %p107, %p108
    %p110 = scmp.ne.s32.totalorder %s96, %s97
    %p111 = scmp.eq.s32.totalorder %s19, 1
    %p112 = por %p110, %p111
    %p114 = scmp.ne.s32.totalorder %s97, %s113
    %p115 = scmp.eq.s32.totalorder %s19, 0
    %p116 = por %p114, %p115
    %s118 = sadd.s32 %s117, 1
    %p121 = scmp.eq.s32.totalorder %s13, 1
    %p122 = scmp.ne.s32.totalorder %s117, %s119
    %p123 = scmp.eq.s32.totalorder %s13, 0
    %p124 = por %p122, %p123
    %p125 = scmp.ne.s32.totalorder %s117, %s119
    %p126 = scmp.eq.s32.totalorder %s18, 1
    %p127 = por %p125, %p126
    %p128 = scmp.ne.s32.totalorder %s119, %s120
    %p129 = scmp.eq.s32.totalorder %s18, 0
    %p130 = por %p128, %p129
    %p131 = scmp.ne.s32.totalorder %s119, %s120
    %p132 = scmp.eq.s32.totalorder %s19, 1
    %p133 = por %p131, %p132
    %p135 = scmp.ne.s32.totalorder %s120, %s134
    %p136 = scmp.eq.s32.totalorder %s19, 0
    %p137 = por %p135, %p136
    %s139 = sadd.s32 %s138, 1
    %p142 = scmp.eq.s32.totalorder %s13, 1
    %p143 = scmp.ne.s32.totalorder %s138, %s140
    %p144 = scmp.eq.s32.totalorder %s13, 0
    %p145 = por %p143, %p144
    %p146 = scmp.ne.s32.totalorder %s138, %s140
    %p147 = scmp.eq.s32.totalorder %s18, 1
    %p148 = por %p146, %p147
    %p149 = scmp.ne.s32.totalorder %s140, %s141
    %p150 = scmp.eq.s32.totalorder %s18, 0
    %p151 = por %p149, %p150
    %p152 = scmp.ne.s32.totalorder %s140, %s141
    %p153 = scmp.eq.s32.totalorder %s19, 1
    %p154 = por %p152, %p153
    %p156 = scmp.ne.s32.totalorder %s141, %s155
    %p157 = scmp.eq.s32.totalorder %s19, 0
    %p158 = por %p156, %p157
    %s159 = ssub.s32 %s20, %s32
    %s160 = ssub.s32 %s21, %s28
    %s161 = sor.u32 %s159, %s160
    %p162 = scmp.eq.s32.totalorder %s161, 0
    %s164 = sadd.s32 %s163, 1
    %s165 = scalar_select %p162, %s163, %s164
    %p168 = pneg %p162
    %p169 = scmp.eq.s32.totalorder %s13, 1
    %p170 = por %p168, %p169
    %p171 = scmp.ne.s32.totalorder %s163, %s166
    %p172 = scmp.eq.s32.totalorder %s13, 0
    %p173 = por %p171, %p172
    %p174 = scmp.ne.s32.totalorder %s163, %s166
    %p175 = scmp.eq.s32.totalorder %s18, 1
    %p176 = por %p174, %p175
    %p177 = scmp.ne.s32.totalorder %s166, %s167
    %p178 = scmp.eq.s32.totalorder %s18, 0
    %p179 = por %p177, %p178
    %p180 = scmp.ne.s32.totalorder %s166, %s167
    %p181 = scmp.eq.s32.totalorder %s19, 1
    %p182 = por %p180, %p181
    %p184 = scmp.ne.s32.totalorder %s167, %s183
    %p185 = scmp.eq.s32.totalorder %s19, 0
    %p186 = por %p184, %p185
    %s187 = ssub.s32 %s20, %s32
    %s188 = ssub.s32 %s21, %s28
    %s189 = sor.u32 %s187, %s188
    %p190 = scmp.eq.s32.totalorder %s189, 0
    %s192 = sadd.s32 %s191, 1
    %s193 = scalar_select %p190, %s191, %s192
    %p196 = pneg %p190
    %p197 = scmp.eq.s32.totalorder %s13, 1
    %p198 = por %p196, %p197
    %p199 = scmp.ne.s32.totalorder %s191, %s194
    %p200 = scmp.eq.s32.totalorder %s13, 0
    %p201 = por %p199, %p200
    %p202 = scmp.ne.s32.totalorder %s191, %s194
    %p203 = scmp.eq.s32.totalorder %s18, 1
    %p204 = por %p202, %p203
    %p205 = scmp.ne.s32.totalorder %s194, %s195
    %p206 = scmp.eq.s32.totalorder %s18, 0
    %p207 = por %p205, %p206
    %p208 = scmp.ne.s32.totalorder %s194, %s195
    %p209 = scmp.eq.s32.totalorder %s19, 1
    %p210 = por %p208, %p209
    %p212 = scmp.ne.s32.totalorder %s195, %s211
    %p213 = scmp.eq.s32.totalorder %s19, 0
    %p214 = por %p212, %p213
    %p215 = scmp.le.s32.totalorder 1, %s13
    %p216 = scmp.lt.s32.totalorder %s13, 3
    %p217 = pnand %p215, %p216
    %p218 = pneg %p217
    // Predicated region
    $region9: #{transducer_forward.28} parent=5 // pred_check
      _
    $region10: #{transducer_forward.28} parent=5 // pred_check_branch
      %220 = sbr.rel (%p217) target = $region12
    $region11: #{transducer_forward.28} parent=5 // pred_region
      %s221 = ssub.s32 %s13, 1
      // Predicated region
      $region13: #{transducer_forward.28} parent=11 // pred_check
        %p222 = pneg %p130
      $region14: #{transducer_forward.28} parent=11 // pred_check_branch
        %224 = sbr.rel (%p222) target = $region16
      $region15: #{transducer_forward.28} parent=11 // pred_region
        _
      $region16: #{transducer_forward.28} parent=11 // pred_fallthru
        _
      // Predicated region
      $region17: #{transducer_forward.28} parent=11 // pred_check
        %p225 = pneg %p151
      $region18: #{transducer_forward.28} parent=11 // pred_check_branch
        %227 = sbr.rel (%p225) target = $region20
      $region19: #{transducer_forward.28} parent=11 // pred_region
        _
      $region20: #{transducer_forward.28} parent=11 // pred_fallthru
        _
    $region12: #{transducer_forward.28} parent=5 // pred_fallthru
      _
    %p228 = scmp.lt.s32.totalorder %s13, 2
    // Predicated region
    $region21: #{transducer_forward.28} parent=5 // pred_check
      %p229 = pneg %p228
    $region22: #{transducer_forward.28} parent=5 // pred_check_branch
      %231 = sbr.rel (%p229) target = $region24
    $region23: #{transducer_forward.28} parent=5 // pred_region
      // Predicated region
      $region25: #{transducer_forward.28} parent=23 // pred_check
        %p232 = pneg %p47
      $region26: #{transducer_forward.28} parent=23 // pred_check_branch
        %234 = sbr.rel (%p232) target = $region28
      $region27: #{transducer_forward.28} parent=23 // pred_region
        %p235 = scmp.lt.s32.totalorder %s20, 1
        %s236 = scalar_select %p235, %s20, 1
        %p237 = scmp.lt.s32.totalorder %s21, 0
        %s238 = scalar_select %p237, %s21, 0
        %s239 = sadd.s32 %s238, %s236
        %s240 = smul.addr %s239, 8
        %s241 = scalar_lea.vmem %s0, %s240
      $region28: #{transducer_forward.28} parent=23 // pred_fallthru
        _
      // Predicated region
      $region29: #{transducer_forward.28} parent=23 // pred_check
        %p242 = pneg %p75
      $region30: #{transducer_forward.28} parent=23 // pred_check_branch
        %244 = sbr.rel (%p242) target = $region32
      $region31: #{transducer_forward.28} parent=23 // pred_region
        %p245 = scmp.lt.s32.totalorder %s20, 1
        %s246 = scalar_select %p245, %s20, 1
        %p247 = scmp.lt.s32.totalorder %s21, 0
        %s248 = scalar_select %p247, %s21, 0
        %s249 = smul.addr %s246, 3
        %s250 = sadd.s32 %s248, %s249
        %s251 = smul.addr %s250, 4
        %s252 = scalar_lea.vmem %s1, %s251
      $region32: #{transducer_forward.28} parent=23 // pred_fallthru
        _
      // Predicated region
      $region33: #{transducer_forward.28} parent=23 // pred_check
        %p253 = pneg %p103
      $region34: #{transducer_forward.28} parent=23 // pred_check_branch
        %255 = sbr.rel (%p253) target = $region36
      $region35: #{transducer_forward.28} parent=23 // pred_region
        %p256 = scmp.lt.s32.totalorder %s20, 1
        %s257 = scalar_select %p256, %s20, 1
        %p258 = scmp.lt.s32.totalorder %s21, 0
        %s259 = scalar_select %p258, %s21, 0
        %s260 = sadd.s32 %s259, %s257
        %s261 = smul.addr %s260, 8
        %s262 = scalar_lea.vmem %s2, %s261
      $region36: #{transducer_forward.28} parent=23 // pred_fallthru
        _
    $region24: #{transducer_forward.28} parent=5 // pred_fallthru
      _
    %p263 = scmp.le.s32.totalorder 1, %s13
    %p264 = scmp.lt.s32.totalorder %s13, 3
    %p265 = pnand %p263, %p264
    %p266 = pneg %p265
    // Predicated region
    $region37: #{transducer_forward.28} parent=5 // pred_check
      _
    $region38: #{transducer_forward.28} parent=5 // pred_check_branch
      %268 = sbr.rel (%p265) target = $region40
    $region39: #{transducer_forward.28} parent=5 // pred_region
      %s269 = ssub.s32 %s13, 1
      %p270 = scmp.lt.s32.totalorder %s22, 1
      %s271 = scalar_select %p270, %s22, 1
      %p272 = scmp.lt.s32.totalorder %s23, 0
      %s273 = scalar_select %p272, %s23, 0
      %s274 = sadd.s32 %s273, %s271
      %s275 = smul.addr %s274, 8
      %s276 = scalar_lea.vmem %s0, %s275
      %p277 = pneg %p53
      %p278 = pneg %p50
      %p279 = scmp.lt.s32.totalorder %s22, 1
      %s280 = scalar_select %p279, %s22, 1
      %p281 = scmp.lt.s32.totalorder %s23, 0
      %s282 = scalar_select %p281, %s23, 0
      %s283 = smul.addr %s280, 3
      %s284 = sadd.s32 %s282, %s283
      %s285 = smul.addr %s284, 4
      %s286 = scalar_lea.vmem %s1, %s285
      %p287 = pneg %p81
      %p288 = pneg %p78
      %p289 = scmp.lt.s32.totalorder %s22, 1
      %s290 = scalar_select %p289, %s22, 1
      %p291 = scmp.lt.s32.totalorder %s23, 0
      %s292 = scalar_select %p291, %s23, 0
      %s293 = sadd.s32 %s292, %s290
      %s294 = smul.addr %s293, 8
      %s295 = scalar_lea.vmem %s2, %s294
      %p296 = pneg %p109
      %p297 = pneg %p106
      %p298 = pneg %p130
      %p299 = pneg %p127
      %p300 = pneg %p151
      %p301 = pneg %p148
      %p302 = pneg %p179
      %p303 = pneg %p176
      %p304 = scmp.lt.s32.totalorder %s22, 1
      %s305 = scalar_select %p304, %s22, 1
      %p306 = scmp.lt.s32.totalorder %s23, 0
      %s307 = scalar_select %p306, %s23, 0
      %s308 = sadd.s32 %s307, %s305
      %s309 = smul.addr %s308, 8
      %s310 = scalar_lea.vmem %s5, %s309
      %p311 = pneg %p207
      %p312 = pneg %p204
      %p313 = scmp.lt.s32.totalorder %s22, 1
      %s314 = scalar_select %p313, %s22, 1
      %p315 = scmp.lt.s32.totalorder %s23, 0
      %s316 = scalar_select %p315, %s23, 0
      %s317 = sadd.s32 %s316, %s314
      %s318 = smul.addr %s317, 8
      %s319 = scalar_lea.vmem %s6, %s318
      %p320 = scmp.lt.s32.totalorder %s22, 1
      %s321 = scalar_select %p320, %s22, 1
      %p322 = scmp.lt.s32.totalorder %s23, 0
      %s323 = scalar_select %p322, %s23, 0
      %s324 = sadd.s32 %s323, %s321
      %s325 = smul.addr %s324, 8
      %s326 = scalar_lea.vmem %s0, %s325
      %p327 = scmp.lt.s32.totalorder %s22, 1
      %s328 = scalar_select %p327, %s22, 1
      %p329 = scmp.lt.s32.totalorder %s23, 0
      %s330 = scalar_select %p329, %s23, 0
      %s331 = smul.addr %s328, 3
      %s332 = sadd.s32 %s330, %s331
      %s333 = smul.addr %s332, 4
      %s334 = scalar_lea.vmem %s1, %s333
      %p335 = scmp.lt.s32.totalorder %s22, 1
      %s336 = scalar_select %p335, %s22, 1
      %p337 = scmp.lt.s32.totalorder %s23, 0
      %s338 = scalar_select %p337, %s23, 0
      %s339 = sadd.s32 %s338, %s336
      %s340 = smul.addr %s339, 8
      %s341 = scalar_lea.vmem %s2, %s340
      %p342 = scmp.lt.s32.totalorder %s22, 1
      %s343 = scalar_select %p342, %s22, 1
      %p344 = scmp.lt.s32.totalorder %s23, 0
      %s345 = scalar_select %p344, %s23, 0
      %s346 = sadd.s32 %s345, %s343
      %s347 = smul.addr %s346, 8
      %s348 = scalar_lea.vmem %s5, %s347
      %p349 = scmp.lt.s32.totalorder %s22, 1
      %s350 = scalar_select %p349, %s22, 1
      %p351 = scmp.lt.s32.totalorder %s23, 0
      %s352 = scalar_select %p351, %s23, 0
      %s353 = sadd.s32 %s352, %s350
      %s354 = smul.addr %s353, 8
      %s355 = scalar_lea.vmem %s6, %s354
      %v357 = vld [vmem:[%s326] sm:$0xff]
      %v358 = vpack.c.bf16 %v357, %v357
      %v359 = vld [vmem:[%s341] sm:$0xff]
      %v360 = vld [vmem:[%s3] sm:$0xf]
      %v361 = vld [vmem:[%s3 + $0x4] sm:$0xf]
      %v362 = vld [vmem:[%s3 + $0x8] sm:$0xf]
      %v363 = vld [vmem:[%s3 + $0xc] sm:$0xf]
      %v364 = vld [vmem:[%s4] sm:$0x1]
      %v365 = vlaneseq
      %v366 = vand.u32 %v365, 127
      %vm367 = vcmp.lt.s32.totalorder %v366, 16
      %v368 = vld [vmem:[%s334] sm:$0xf]
      %v369 = vadd.bf16 %v358, %v368
      %v370 = vtanh.bf16.pop %v369
      %v372 = vlaneseq
      %v373 = vshrl.u32 %v372, 7
      %v374 = vsub.s32 0, %v373
      %v375 = vrot.slane %v364, %v374
      %v381 = vunpack.c.l.b16 %v360
      %v382 = vunpack.c.l.b16 %v361
      %v383 = vunpack.c.l.b16 %v362
      %v384 = vunpack.c.l.b16 %v363
      %v385 = vpack.c.b16 %v382, %v381
      %v386 = vpack.c.b16 %v384, %v383
      %vm389 = vcmask 261120
      %v391 = vsel %vm389, %v370, 0
      %393 = vmatprep.subr.bf16.mxu0 0
      %394 = vmatpush1.bf16.msra.mxu0 0
      %395 = vmatprep.subr.bf16.mxu0 0
      %396 = vmatpush1.bf16.msra.mxu0 0
      %397 = vmatprep.subr.bf16.mxu0 0
      %398 = vmatpush1.bf16.msra.mxu0 0
      %399 = vmatprep.subr.bf16.mxu0 0
      %400 = vmatpush1.bf16.msra.mxu0 0
      %401 = vmatprep.subr.bf16.mxu0 0
      %402 = vmatpush1.bf16.msra.mxu0 0
      %403 = vmatprep.subr.bf16.mxu0 0
      %404 = vmatpush1.bf16.msra.mxu0 0
      %405 = vmatprep.subr.bf16.mxu0 0
      %406 = vmatpush1.bf16.msra.mxu0 %v386
      %407 = vmatprep.subr.bf16.mxu0 0
      %408 = vmatpush1.bf16.msra.mxu0 %v385
      %409 = vmatprep.subr.bf16.mxu0 0
      %410 = vmatpush2.bf16.msra.mxu0 0
      %411 = vmatprep.subr.bf16.mxu0 0
      %412 = vmatpush2.bf16.msra.mxu0 0
      %413 = vmatprep.subr.bf16.mxu0 0
      %414 = vmatpush2.bf16.msra.mxu0 0
      %415 = vmatprep.subr.bf16.mxu0 0
      %416 = vmatpush2.bf16.msra.mxu0 0
      %417 = vmatprep.subr.bf16.mxu0 0
      %418 = vmatpush2.bf16.msra.mxu0 0
      %419 = vmatprep.subr.bf16.mxu0 0
      %420 = vmatpush2.bf16.msra.mxu0 0
      %421 = vmatprep.subr.bf16.mxu0 0
      %422 = vmatpush2.bf16.msra.mxu0 0
      %423 = vmatprep.subr.bf16.mxu0 0
      %424 = vmatpush2.bf16.msra.mxu0 0
      %425 = vmatprep.mubr.bf16.mxu0 0
      %426 = vmatmul.mubr.bf16.gmra.mxu0 %v391
      %v427 = vpop.f32.mrf.mxu0
      %v428 = vadd.f32 %v375, %v427
      %v429 = vpop.f32.mrf.mxu0
      %v430 = vpop.f32.mrf.mxu0
      %v431 = vpop.f32.mrf.mxu0
      %432 = vdwg.mxu0
      %v433 = vsel %vm367, %v428, -1e+30
      %434 = vmax.xlane.f32.xlu0 %v433
      %v435 = vpop.xlane.xlu0 %434
      %v436 = vsub.f32 %v433, %v435
      %v437 = vmul.f32 %v436, 1.442695
      %v438 = vpow.pop %v437
      %439 = vadd.xlane.f32.xlu0 %v438
      %v440 = vpop.xlane.xlu0 %439
      %v441 = vlog2.pop %v440
      %v442 = vmul.f32 %v441, 0.6931472
      %v443 = vadd.f32 %v435, %v442
      %444 = vset.pattern.permute.xlu0 0
      %445 = vperm.xlu0 %444, %v359
      %v446 = vpop.permute.xlu0 %445
      %vm447 = vcmp.eq.s32.totalorder %v366, %v446
      %v448 = vsel %vm447, %v433, 0.0
      %449 = vadd.xlane.f32.xlu0 %v448
      %v450 = vpop.xlane.xlu0 %449
      %vm451 = vcmp.eq.s32.totalorder %v366, 0
      %v452 = vsel %vm451, %v433, 0.0
      %453 = vadd.xlane.f32.xlu0 %v452
      %v454 = vpop.xlane.xlu0 %453
      %v455 = vsub.f32 %v450, %v443
      %v456 = vsub.f32 %v454, %v443
      %s457 = scalar_lea.vmem %s334, 4
      %v458 = vld [vmem:[%s457] sm:$0xf]
      %v459 = vadd.bf16 %v358, %v458
      %v460 = vtanh.bf16.pop %v459
      %v462 = vsel %vm389, %v460, 0
      %464 = vmatprep.subr.bf16.mxu0 0
      %465 = vmatpush1.bf16.msra.mxu0 0
      %466 = vmatprep.subr.bf16.mxu0 0
      %467 = vmatpush1.bf16.msra.mxu0 0
      %468 = vmatprep.subr.bf16.mxu0 0
      %469 = vmatpush1.bf16.msra.mxu0 0
      %470 = vmatprep.subr.bf16.mxu0 0
      %471 = vmatpush1.bf16.msra.mxu0 0
      %472 = vmatprep.subr.bf16.mxu0 0
      %473 = vmatpush1.bf16.msra.mxu0 0
      %474 = vmatprep.subr.bf16.mxu0 0
      %475 = vmatpush1.bf16.msra.mxu0 0
      %476 = vmatprep.subr.bf16.mxu0 0
      %477 = vmatpush1.bf16.msra.mxu0 %v386
      %478 = vmatprep.subr.bf16.mxu0 0
      %479 = vmatpush1.bf16.msra.mxu0 %v385
      %480 = vmatprep.subr.bf16.mxu0 0
      %481 = vmatpush2.bf16.msra.mxu0 0
      %482 = vmatprep.subr.bf16.mxu0 0
      %483 = vmatpush2.bf16.msra.mxu0 0
      %484 = vmatprep.subr.bf16.mxu0 0
      %485 = vmatpush2.bf16.msra.mxu0 0
      %486 = vmatprep.subr.bf16.mxu0 0
      %487 = vmatpush2.bf16.msra.mxu0 0
      %488 = vmatprep.subr.bf16.mxu0 0
      %489 = vmatpush2.bf16.msra.mxu0 0
      %490 = vmatprep.subr.bf16.mxu0 0
      %491 = vmatpush2.bf16.msra.mxu0 0
      %492 = vmatprep.subr.bf16.mxu0 0
      %493 = vmatpush2.bf16.msra.mxu0 0
      %494 = vmatprep.subr.bf16.mxu0 0
      %495 = vmatpush2.bf16.msra.mxu0 0
      %496 = vmatprep.mubr.bf16.mxu0 0
      %497 = vmatmul.mubr.bf16.gmra.mxu0 %v462
      %v498 = vpop.f32.mrf.mxu0
      %v499 = vadd.f32 %v375, %v498
      %v500 = vpop.f32.mrf.mxu0
      %v501 = vpop.f32.mrf.mxu0
      %v502 = vpop.f32.mrf.mxu0
      %503 = vdwg.mxu0
      %v504 = vsel %vm367, %v499, -1e+30
      %505 = vmax.xlane.f32.xlu0 %v504
      %v506 = vpop.xlane.xlu0 %505
      %v507 = vsub.f32 %v504, %v506
      %v508 = vmul.f32 %v507, 1.442695
      %v509 = vpow.pop %v508
      %510 = vadd.xlane.f32.xlu0 %v509
      %v511 = vpop.xlane.xlu0 %510
      %v512 = vlog2.pop %v511
      %v513 = vmul.f32 %v512, 0.6931472
      %v514 = vadd.f32 %v506, %v513
      %515 = vset.pattern.permute.xlu0 1
      %516 = vperm.xlu0 %515, %v359
      %v517 = vpop.permute.xlu0 %516
      %vm518 = vcmp.eq.s32.totalorder %v366, %v517
      %v519 = vsel %vm518, %v504, 0.0
      %520 = vadd.xlane.f32.xlu0 %v519
      %v521 = vpop.xlane.xlu0 %520
      %v522 = vsel %vm451, %v504, 0.0
      %523 = vadd.xlane.f32.xlu0 %v522
      %v524 = vpop.xlane.xlu0 %523
      %v525 = vsub.f32 %v521, %v514
      %v526 = vsub.f32 %v524, %v514
      %s527 = scalar_lea.vmem %s334, 8
      %v528 = vld [vmem:[%s527] sm:$0xf]
      %v529 = vadd.bf16 %v358, %v528
      %v530 = vtanh.bf16.pop %v529
      %v532 = vsel %vm389, %v530, 0
      %534 = vmatprep.subr.bf16.mxu0 0
      %535 = vmatpush1.bf16.msra.mxu0 0
      %536 = vmatprep.subr.bf16.mxu0 0
      %537 = vmatpush1.bf16.msra.mxu0 0
      %538 = vmatprep.subr.bf16.mxu0 0
      %539 = vmatpush1.bf16.msra.mxu0 0
      %540 = vmatprep.subr.bf16.mxu0 0
      %541 = vmatpush1.bf16.msra.mxu0 0
      %542 = vmatprep.subr.bf16.mxu0 0
      %543 = vmatpush1.bf16.msra.mxu0 0
      %544 = vmatprep.subr.bf16.mxu0 0
      %545 = vmatpush1.bf16.msra.mxu0 0
      %546 = vmatprep.subr.bf16.mxu0 0
      %547 = vmatpush1.bf16.msra.mxu0 %v386
      %548 = vmatprep.subr.bf16.mxu0 0
      %549 = vmatpush1.bf16.msra.mxu0 %v385
      %550 = vmatprep.subr.bf16.mxu0 0
      %551 = vmatpush2.bf16.msra.mxu0 0
      %552 = vmatprep.subr.bf16.mxu0 0
      %553 = vmatpush2.bf16.msra.mxu0 0
      %554 = vmatprep.subr.bf16.mxu0 0
      %555 = vmatpush2.bf16.msra.mxu0 0
      %556 = vmatprep.subr.bf16.mxu0 0
      %557 = vmatpush2.bf16.msra.mxu0 0
      %558 = vmatprep.subr.bf16.mxu0 0
      %559 = vmatpush2.bf16.msra.mxu0 0
      %560 = vmatprep.subr.bf16.mxu0 0
      %561 = vmatpush2.bf16.msra.mxu0 0
      %562 = vmatprep.subr.bf16.mxu0 0
      %563 = vmatpush2.bf16.msra.mxu0 0
      %564 = vmatprep.subr.bf16.mxu0 0
      %565 = vmatpush2.bf16.msra.mxu0 0
      %566 = vmatprep.mubr.bf16.mxu0 0
      %567 = vmatmul.mubr.bf16.gmra.mxu0 %v532
      %v568 = vpop.f32.mrf.mxu0
      %v569 = vadd.f32 %v375, %v568
      %v570 = vpop.f32.mrf.mxu0
      %v571 = vpop.f32.mrf.mxu0
      %v572 = vpop.f32.mrf.mxu0
      %573 = vdwg.mxu0
      %v574 = vsel %vm367, %v569, -1e+30
      %575 = vmax.xlane.f32.xlu0 %v574
      %v576 = vpop.xlane.xlu0 %575
      %v577 = vsub.f32 %v574, %v576
      %v578 = vmul.f32 %v577, 1.442695
      %v579 = vpow.pop %v578
      %580 = vadd.xlane.f32.xlu0 %v579
      %v581 = vpop.xlane.xlu0 %580
      %v582 = vlog2.pop %v581
      %v583 = vmul.f32 %v582, 0.6931472
      %v584 = vadd.f32 %v576, %v583
      %585 = vset.pattern.permute.xlu0 2
      %586 = vperm.xlu0 %585, %v359
      %v587 = vpop.permute.xlu0 %586
      %vm588 = vcmp.eq.s32.totalorder %v366, %v587
      %v589 = vsel %vm588, %v574, 0.0
      %590 = vadd.xlane.f32.xlu0 %v589
      %v591 = vpop.xlane.xlu0 %590
      %v592 = vsel %vm451, %v574, 0.0
      %593 = vadd.xlane.f32.xlu0 %v592
      %v594 = vpop.xlane.xlu0 %593
      %v595 = vsub.f32 %v591, %v584
      %v596 = vsub.f32 %v594, %v584
      %vm597 = vcmask 7168
      %v598 = vsel %vm597, %v455, %v525
      %vm599 = vcmask 15360
      %v600 = vsel %vm599, %v598, %v595
      %vm601 = vcmask 23552
      %602 = vst.msk [vmem:[%s348] sm:$0xff] %vm601, %v600
      %v603 = vsel %vm597, %v456, %v526
      %v604 = vsel %vm599, %v603, %v596
      %605 = vst.msk [vmem:[%s355] sm:$0xff] %vm601, %v604
      %p606 = scmp.lt.s32.totalorder %s22, 1
      %s607 = scalar_select %p606, %s22, 1
      %p608 = scmp.lt.s32.totalorder %s23, 0
      %s609 = scalar_select %p608, %s23, 0
      %s610 = sadd.s32 %s609, %s607
      %s611 = smul.addr %s610, 8
      %s612 = scalar_lea.vmem %s5, %s611
      %p613 = scmp.lt.s32.totalorder %s22, 1
      %s614 = scalar_select %p613, %s22, 1
      %p615 = scmp.lt.s32.totalorder %s23, 0
      %s616 = scalar_select %p615, %s23, 0
      %s617 = sadd.s32 %s616, %s614
      %s618 = smul.addr %s617, 8
      %s619 = scalar_lea.vmem %s6, %s618
      // Predicated region
      $region41: #{transducer_forward.28} parent=39 // pred_check
        %p620 = pneg %p176
      $region42: #{transducer_forward.28} parent=39 // pred_check_branch
        %622 = sbr.rel (%p620) target = $region44
      $region43: #{transducer_forward.28} parent=39 // pred_region
        _
      $region44: #{transducer_forward.28} parent=39 // pred_fallthru
        _
      // Predicated region
      $region45: #{transducer_forward.28} parent=39 // pred_check
        %p623 = pneg %p204
      $region46: #{transducer_forward.28} parent=39 // pred_check_branch
        %625 = sbr.rel (%p623) target = $region48
      $region47: #{transducer_forward.28} parent=39 // pred_region
        _
      $region48: #{transducer_forward.28} parent=39 // pred_fallthru
        _
    $region40: #{transducer_forward.28} parent=5 // pred_fallthru
      _
    %p626 = scmp.le.s32.totalorder 2, %s13
    // Predicated region
    $region49: #{transducer_forward.28} parent=5 // pred_check
      %p627 = pneg %p626
    $region50: #{transducer_forward.28} parent=5 // pred_check_branch
      %629 = sbr.rel (%p627) target = $region52
    $region51: #{transducer_forward.28} parent=5 // pred_region
      %s630 = ssub.s32 %s13, 2
      // Predicated region
      $region53: #{transducer_forward.28} parent=51 // pred_check
        %p631 = pneg %p182
      $region54: #{transducer_forward.28} parent=51 // pred_check_branch
        %633 = sbr.rel (%p631) target = $region56
      $region55: #{transducer_forward.28} parent=51 // pred_region
        %p634 = scmp.lt.s32.totalorder %s24, 1
        %s635 = scalar_select %p634, %s24, 1
        %p636 = scmp.lt.s32.totalorder %s25, 0
        %s637 = scalar_select %p636, %s25, 0
        %s638 = sadd.s32 %s637, %s635
        %s639 = smul.addr %s638, 8
        %s640 = scalar_lea.vmem %s5, %s639
      $region56: #{transducer_forward.28} parent=51 // pred_fallthru
        _
      // Predicated region
      $region57: #{transducer_forward.28} parent=51 // pred_check
        %p641 = pneg %p210
      $region58: #{transducer_forward.28} parent=51 // pred_check_branch
        %643 = sbr.rel (%p641) target = $region60
      $region59: #{transducer_forward.28} parent=51 // pred_region
        %p644 = scmp.lt.s32.totalorder %s24, 1
        %s645 = scalar_select %p644, %s24, 1
        %p646 = scmp.lt.s32.totalorder %s25, 0
        %s647 = scalar_select %p646, %s25, 0
        %s648 = sadd.s32 %s647, %s645
        %s649 = smul.addr %s648, 8
        %s650 = scalar_lea.vmem %s6, %s649
      $region60: #{transducer_forward.28} parent=51 // pred_fallthru
        _
    $region52: #{transducer_forward.28} parent=5 // pred_fallthru
      _
  $region6: #{transducer_forward.28} parent=0 // loop_footer
    %s17 = sadd.s32 1, %s13
  $region7: #{transducer_forward.28} parent=0 // loop_footer_branch
    %12 = sbr.rel target = $region3
  $region8: #{transducer_forward.28} parent=0 // loop_exit
    _

// kernel: transducer_forward.29
$region0: #{transducer_forward.29}
  #allocation0 [shape = 'u32[]', space=smem, size = 0x4, offset = 0x4, fixed_abs, tag = 'smem constant byte address 0x4 - core index']
  #allocation1 [shape = 'u32[144,128]{1,0:T(1,128)}', space=vmem, size = 0x12000, scoped, tag = 'internal scratch']
  #allocation2 [shape = 'f32[8,128]{1,0:T(8,128)}', space=vmem, size = 0x1000, scoped, tag = 'scratch operand']
  %s0 = inlined_call_operand.vmem [shape: f32[9,8,128], index: 0, kind: input, shape index: {}]
  %s1 = inlined_call_operand.vmem [shape: f32[9,8,128], index: 1, kind: input, shape index: {}]
  %s2 = inlined_call_operand.vmem [shape: s32[8,1], index: 2, kind: input, shape index: {}]
  %s3 = inlined_call_operand.vmem [shape: f32[8,128], index: 3, kind: input, shape index: {}]
  %s4 = inlined_call_operand.vmem [shape: f32[8,128], index: 4, kind: output, shape index: {}]
  %s5 = sld [smem:[#allocation0]]
  $region37: #{transducer_forward.29} parent=0
    _
  %s7 = ssub.s32 1, %s5
  %s8 = scalar_select 0, %s7, %s5
  // Predicated region
  $region2: #{transducer_forward.29} parent=0 // pred_check
    _
  $region3: #{transducer_forward.29} parent=0 // pred_check_branch
    %10 = sbr.rel (0) target = $region5
  $region4: #{transducer_forward.29} parent=0 // pred_region
    _
  $region5: #{transducer_forward.29} parent=0 // pred_fallthru
    _
  // Predicated region
  $region6: #{transducer_forward.29} parent=0 // pred_check
    _
  $region7: #{transducer_forward.29} parent=0 // pred_check_branch
    %12 = sbr.rel (0) target = $region9
  $region8: #{transducer_forward.29} parent=0 // pred_region
    _
  $region9: #{transducer_forward.29} parent=0 // pred_fallthru
    _
  // Predicated region
  $region10: #{transducer_forward.29} parent=0 // pred_check
    _
  $region11: #{transducer_forward.29} parent=0 // pred_check_branch
    %14 = sbr.rel (0) target = $region13
  $region12: #{transducer_forward.29} parent=0 // pred_region
    _
  $region13: #{transducer_forward.29} parent=0 // pred_fallthru
    _
  // Predicated region
  $region14: #{transducer_forward.29} parent=0 // pred_check
    _
  $region15: #{transducer_forward.29} parent=0 // pred_check_branch
    %16 = sbr.rel (0) target = $region17
  $region16: #{transducer_forward.29} parent=0 // pred_region
    _
  $region17: #{transducer_forward.29} parent=0 // pred_fallthru
    _
  %v17 = vlaneseq
  %v18 = vand.u32 %v17, 127
  %p19 = scmp.eq.s32.totalorder 0, 0
  // Predicated region
  $region18: #{transducer_forward.29} parent=0 // pred_check
    %p20 = pneg %p19
  $region19: #{transducer_forward.29} parent=0 // pred_check_branch
    %22 = sbr.rel (%p20) target = $region21
  $region20: #{transducer_forward.29} parent=0 // pred_region
    %23 = vst [vmem:[#allocation2] sm:$0xff] 0.0
    %24 = vst [vmem:[%s4] sm:$0xff] 0.0
  $region21: #{transducer_forward.29} parent=0 // pred_fallthru
    _
  %v25 = vld [vmem:[%s2] sm:$0xff]
  %v26 = vld [vmem:[%s3] sm:$0xff]
  loop: start=0, step=1, limit=9
  $region22: #{transducer_forward.29} parent=0 // loop_pre_header
    _
  $region23: #{transducer_forward.29} parent=0 // loop_header
    %s28 = sphi 0, %s32
    %p29 = scmp.ge.s32.totalorder %s28, 9
  $region24: #{transducer_forward.29} parent=0 // loop_header_branch
    %31 = sbr.rel (%p29) target = $region28
  $region25: #{transducer_forward.29} parent=0 // loop_body
    %s33 = smul.u32 0, 9
    %s34 = sadd.s32 %s33, %s28
    %s35 = smul.u32 %s28, 8
    %s36 = scalar_lea.vmem %s0, %s35
    %v37 = vld [vmem:[%s36] sm:$0xff]
    %v38 = vld [vmem:[#allocation2] sm:$0xff]
    %s39 = scalar_lea.vmem %s1, %s35
    %v40 = vld [vmem:[%s39] sm:$0xff]
    %v41 = vadd.f32 %v38, %v40
    %vm42 = vcmp.lt.s32.totalorder %v18, 1
    %43 = vrot.lane.b32.xlu0 %v41, 1
    %v44 = vpop.permute.xlu0 %43
    %v45 = vsel %vm42, -1e+30, %v44
    %46 = vrot.lane.b32.xlu0 %v37, 1
    %v47 = vpop.permute.xlu0 %46
    %v48 = vsel %vm42, 0.0, %v47
    %v49 = vadd.f32 %v45, %v37
    %v50 = vmax.f32 %v41, %v49
    %v51 = vsub.f32 %v41, %v49
    %vm52 = vcmp.ne.f32.partialorder %v51, %v51
    %v53 = vadd.f32 %v41, %v49
    %v54 = vand.u32 2147483647, %v51
    %v55 = vsub.f32 0.0, %v54
    %v56 = vmul.f32 %v55, 1.442695
    %v57 = vpow.pop %v56
    %v58 = vadd.f32 %v57, 1.0
    %v59 = vlog2.pop %v58
    %v60 = vmul.f32 %v59, 0.6931472
    %v61 = vmul.f32 -0.5, %v57
    %v62 = vadd.f32 %v61, 1.0
    %v63 = vmul.f32 %v62, %v57
    %v64 = vand.u32 2147483647, %v57
    %vm65 = vcmp.lt.f32.partialorder %v64, 0.0004427343
    %v66 = vsel %vm65, %v63, %v60
    %v67 = vadd.f32 %v50, %v66
    %v68 = vsel %vm52, %v53, %v67
    %v69 = vadd.f32 %v48, %v37
    %vm70 = vcmp.lt.s32.totalorder %v18, 2
    %71 = vrot.lane.b32.xlu0 %v68, 2
    %v72 = vpop.permute.xlu0 %71
    %v73 = vsel %vm70, -1e+30, %v72
    %74 = vrot.lane.b32.xlu0 %v69, 2
    %v75 = vpop.permute.xlu0 %74
    %v76 = vsel %vm70, 0.0, %v75
    %v77 = vadd.f32 %v73, %v69
    %v78 = vmax.f32 %v68, %v77
    %v79 = vsub.f32 %v68, %v77
    %vm80 = vcmp.ne.f32.partialorder %v79, %v79
    %v81 = vadd.f32 %v68, %v77
    %v82 = vand.u32 2147483647, %v79
    %v83 = vsub.f32 0.0, %v82
    %v84 = vmul.f32 %v83, 1.442695
    %v85 = vpow.pop %v84
    %v86 = vadd.f32 %v85, 1.0
    %v87 = vlog2.pop %v86
    %v88 = vmul.f32 %v87, 0.6931472
    %v89 = vmul.f32 -0.5, %v85
    %v90 = vadd.f32 %v89, 1.0
    %v91 = vmul.f32 %v90, %v85
    %v92 = vand.u32 2147483647, %v85
    %vm93 = vcmp.lt.f32.partialorder %v92, 0.0004427343
    %v94 = vsel %vm93, %v91, %v88
    %v95 = vadd.f32 %v78, %v94
    %v96 = vsel %vm80, %v81, %v95
    %v97 = vadd.f32 %v76, %v69
    %vm98 = vcmp.lt.s32.totalorder %v18, 4
    %99 = vrot.lane.b32.xlu0 %v96, 4
    %v100 = vpop.permute.xlu0 %99
    %v101 = vsel %vm98, -1e+30, %v100
    %v102 = vadd.f32 %v101, %v97
    %v103 = vmax.f32 %v96, %v102
    %v104 = vsub.f32 %v96, %v102
    %vm105 = vcmp.ne.f32.partialorder %v104, %v104
    %v106 = vadd.f32 %v96, %v102
    %v107 = vand.u32 2147483647, %v104
    %v108 = vsub.f32 0.0, %v107
    %v109 = vmul.f32 %v108, 1.442695
    %v110 = vpow.pop %v109
    %v111 = vadd.f32 %v110, 1.0
    %v112 = vlog2.pop %v111
    %v113 = vmul.f32 %v112, 0.6931472
    %v114 = vmul.f32 -0.5, %v110
    %v115 = vadd.f32 %v114, 1.0
    %v116 = vmul.f32 %v115, %v110
    %v117 = vand.u32 2147483647, %v110
    %vm118 = vcmp.lt.f32.partialorder %v117, 0.0004427343
    %v119 = vsel %vm118, %v116, %v113
    %v120 = vadd.f32 %v103, %v119
    %v121 = vsel %vm105, %v106, %v120
    %122 = vst [vmem:[#allocation2] sm:$0xff] %v121
    %v123 = vld [vmem:[%s4] sm:$0xff]
    %v124 = vstv %s34
    %vm125 = vcmp.eq.s32.totalorder %v25, %v124
    %v126 = vmul.f32 %v121, %v26
    %v127 = vsel %vm125, 1, 0
    %128 = vset.pattern.permute.xlu0 0
    %129 = vperm.xlu0 %128, %v127
    %v130 = vpop.permute.xlu0 %129
    %vm131 = vcmp.eq.s32.totalorder %v130, 1
    %v132 = vsel %vm131, %v126, 0.0
    %v133 = vadd.f32 %v123, %v132
    %134 = vst [vmem:[%s4] sm:$0xff] %v133
  $region26: #{transducer_forward.29} parent=0 // loop_footer
    %s32 = sadd.s32 1, %s28
  $region27: #{transducer_forward.29} parent=0 // loop_footer_branch
    %27 = sbr.rel target = $region23
  $region28: #{transducer_forward.29} parent=0 // loop_exit
    _
  %vm135 = vcmp.lt.s32.totalorder %v18, 5
  %v136 = vld [vmem:[#allocation2] sm:$0xff]
  %v137 = vsel %vm135, %v136, -1e+30
  %138 = vst [vmem:[#allocation2] sm:$0xff] %v137
  // Predicated region
  $region29: #{transducer_forward.29} parent=0 // pred_check
    _
  $region30: #{transducer_forward.29} parent=0 // pred_check_branch
    %140 = sbr.rel (0) target = $region32
  $region31: #{transducer_forward.29} parent=0 // pred_region
    _
  $region32: #{transducer_forward.29} parent=0 // pred_fallthru
    _
  // Predicated region
  $region33: #{transducer_forward.29} parent=0 // pred_check
    _
  $region34: #{transducer_forward.29} parent=0 // pred_check_branch
    %142 = sbr.rel (0) target = $region36
  $region35: #{transducer_forward.29} parent=0 // pred_region
    _
  $region36: #{transducer_forward.29} parent=0 // pred_fallthru
    _

</llo_original>
